<compile_context>
chip_gen: v7x
topology: tpu7x:2x2x1
jax: 0.10.0
libtpu: 0.0.40
codegen_flags: <defaults>
</compile_context>

<pallas_src>
import jax
import jax.numpy as jnp
from jax import lax
from jax.experimental import pallas as pl
from jax.experimental.pallas import tpu as pltpu


# ---------------------------------------------------------------------------
# Fused Pallas kernel: conv (single folded-K matmul) + folded BN + LeakyReLU
#                      (+ optional fused max-pool), channels-first output.
# ---------------------------------------------------------------------------
def _make_conv_block_kernel(*, KH, KW, OH, OW, Cin, Cout, stride, kh, kw,
                            PH, PW, out_rows, out_cols):
    pooling = kh is not None
    taps = [(di, dj) for di in range(KH) for dj in range(KW)]
    pad_rows = out_cols - out_rows  # zero-pad so the stored lane dim % 128 == 0

    def _span(start, size):
        if stride == 1:
            return pl.ds(start, size)
        return pl.ds(start, size, stride=stride)

    def kernel(x_ref, w_ref, shift_ref, o_ref, *scratch):
        # --- conv: build the (OH*OW, KH*KW*Cin) patch matrix in registers
        #     (per-tap ref slices, lane concat) and run ONE MXU matmul with
        #     K = KH*KW*Cin against the BN-scaled bf16 weights.
        slabs = []
        for (di, dj) in taps:
            s = x_ref[0, _span(di, OH), _span(dj, OW), :]      # (OH, OW, Cin) bf16
            slabs.append(s.reshape(OH * OW, Cin))
        big = slabs[0] if len(slabs) == 1 else jnp.concatenate(slabs, axis=-1)
        acc = jnp.dot(big, w_ref[...],
                      preferred_element_type=jnp.float32)      # (OH*OW, Cout) f32

        # --- fused floor-mode max-pool on the pre-activation accumulator.
        if pooling:
            (scr,) = scratch                                   # (PH, OW, Cout) f32
            a4 = acc[:PH * kh * OW, :].reshape(PH, kh, OW, Cout)
            rowmax = a4[:, 0]
            for i in range(1, kh):
                rowmax = jnp.maximum(rowmax, a4[:, i])         # (PH, OW, Cout)
            # Stride-kw sublane selection needs a strided ref read -> bounce the
            # small row-pooled tile through VMEM scratch.
            # TODO(synk): keep this in registers once Mosaic supports the
            #   sub-(8,128) reshape / strided value slice cleanly.
            scr[...] = rowmax
            win = scr[:, pl.ds(0, PW, stride=kw), :]
            for j in range(1, kw):
                win = jnp.maximum(win, scr[:, pl.ds(j, PW, stride=kw), :])
            res = win.reshape(PH * PW, Cout)                   # (out_rows, Cout)
        else:
            res = acc                                          # (out_rows, Cout)

        # --- lane-dense channels-first output: pad spatial rows to a multiple
        #     of 128 and transpose the small pooled tile on the XLU (idle here).
        if pad_rows:
            res = jnp.concatenate(
                [res, jnp.zeros((pad_rows, Cout), jnp.float32)], axis=0)
        res_t = jnp.transpose(res, (1, 0))                     # (Cout, out_cols)

        # --- folded-BN shift + LeakyReLU(0.1); f32 epilogue (v5e has no bf16 VPU).
        y = res_t + shift_ref[...]                             # shift: (Cout, 1)
        o_ref[0] = jnp.maximum(y, 0.1 * y)

    return kernel


# ---------------------------------------------------------------------------
# Wrapper
# ---------------------------------------------------------------------------
def conv_block_forward(x_nchw, weight, gamma, beta, run_mean, run_var,
                       kernel_size, pool, stride=1, eps=1e-5):
    pad = 1 if kernel_size == 3 else 0
    N, Cin, H, W = x_nchw.shape
    Cout = weight.shape[0]
    KH = KW = kernel_size
    OH = (H + 2 * pad - KH) // stride + 1
    OW = (W + 2 * pad - KW) // stride + 1
    Hp, Wp = H + 2 * pad, W + 2 * pad
    K = KH * KW * Cin

    # Light XLA prep: NHWC + zero pad + bf16 cast (single pass, no HBM im2col).
    x = jnp.transpose(x_nchw, (0, 2, 3, 1))
    xp = jnp.pad(x, ((0, 0), (pad, pad), (pad, pad), (0, 0))).astype(jnp.bfloat16)

    # Fold the BN scale into the conv weights (one-time O(K*Cout)).
    # Weight layout (K, Cout) with K-order (di, dj, ci) matching the in-kernel
    # tap concatenation order.
    inv_std = (gamma / jnp.sqrt(run_var + eps)).astype(jnp.float32)
    w_scaled = weight.astype(jnp.float32) * inv_std[:, None, None, None]
    w2 = jnp.transpose(w_scaled, (2, 3, 1, 0)).reshape(K, Cout).astype(jnp.bfloat16)
    shift = (beta - run_mean * inv_std).reshape(Cout, 1).astype(jnp.float32)

    if pool == 1:
        kh, kw = 2, 2
    elif pool == 2:
        kh, kw = 3, 5
    else:
        kh = kw = None

    if kh is not None:
        PH, PW = OH // kh, OW // kw          # floor mode == F.max_pool2d default
        out_rows = PH * PW
        scratch_shapes = [pltpu.VMEM((PH, OW, Cout), jnp.float32)]
    else:
        PH = PW = None
        out_rows = OH * OW
        scratch_shapes = []
    out_cols = ((out_rows + 127) // 128) * 128      # lane-dense (unmasked) stores

    kernel = _make_conv_block_kernel(
        KH=KH, KW=KW, OH=OH, OW=OW, Cin=Cin, Cout=Cout, stride=stride,
        kh=kh, kw=kw, PH=PH, PW=PW, out_rows=out_rows, out_cols=out_cols)

    # VMEM budget: padded double-buffered in/out tiles + resident weights +
    # scratch + headroom, capped at ~80% of physical VMEM (leaves compiler
    # scratch headroom on 64 MiB v7x; not artificially capped on v5e/v6e).
    def _rup(v, m):
        return -(-v // m) * m

    try:
        vmem_cap = int(pltpu.get_tpu_info().vmem_capacity_bytes)
    except Exception:
        vmem_cap = 64 * 1024 * 1024
    in_tile = Hp * _rup(Wp, 16) * _rup(Cin, 128) * 2
    w_tile = _rup(K, 16) * _rup(Cout, 128) * 2
    shift_tile = _rup(Cout, 8) * 128 * 4
    out_tile = _rup(Cout, 8) * _rup(out_cols, 128) * 4
    scr_tile = (PH * _rup(OW, 8) * _rup(Cout, 128) * 4) if kh is not None else 0
    need = 2 * (in_tile + out_tile) + 2 * (w_tile + shift_tile) + scr_tile + (4 << 20)
    vmem_limit = int(min(max(need, 16 * 1024 * 1024), int(0.8 * vmem_cap)))

    flops = 2 * N * OH * OW * K * Cout
    bytes_accessed = int(N * Hp * Wp * Cin * 2 + K * Cout * 2 + Cout * 4
                         + N * Cout * out_cols * 4)

    out = pl.pallas_call(
        kernel,
        out_shape=jax.ShapeDtypeStruct((N, Cout, out_cols), jnp.float32),
        grid_spec=pltpu.PrefetchScalarGridSpec(
            num_scalar_prefetch=0,
            grid=(N,),
            in_specs=[
                pl.BlockSpec((1, Hp, Wp, Cin), lambda n: (n, 0, 0, 0)),
                pl.BlockSpec((K, Cout), lambda n: (0, 0)),
                pl.BlockSpec((Cout, 1), lambda n: (0, 0)),
            ],
            out_specs=pl.BlockSpec((1, Cout, out_cols), lambda n: (n, 0, 0)),
            scratch_shapes=scratch_shapes,
        ),
        compiler_params=pltpu.CompilerParams(
            dimension_semantics=("parallel",),
            vmem_limit_bytes=vmem_limit),
        cost_estimate=pl.CostEstimate(flops=flops, transcendentals=0,
                                      bytes_accessed=bytes_accessed),
    )(xp, w2, shift)

    if out_cols != out_rows:
        out = out[:, :, :out_rows]       # trim lane padding (tiny XLA slice)
    if kh is not None:
        return out.reshape(N, Cout, PH, PW)
    return out.reshape(N, Cout, OH, OW)


# ---------------------------------------------------------------------------
# Pure-JAX reference (for sanity checking)
# ---------------------------------------------------------------------------
def conv_block_reference(x, weight, gamma, beta, run_mean, run_var,
                         kernel_size, pool, stride=1, eps=1e-5):
    pad = 1 if kernel_size == 3 else 0
    out = lax.conv_general_dilated(
        x, weight, window_strides=(stride, stride),
        padding=((pad, pad), (pad, pad)),
        dimension_numbers=('NCHW', 'OIHW', 'NCHW'))
    s = (gamma / jnp.sqrt(run_var + eps))[None, :, None, None]
    b = (beta - run_mean * gamma / jnp.sqrt(run_var + eps))[None, :, None, None]
    out = out * s + b
    out = jnp.where(out >= 0, out, 0.1 * out)
    if pool == 1:
        win = (1, 1, 2, 2)
    elif pool == 2:
        win = (1, 1, 3, 5)
    else:
        win = None
    if win is not None:
        out = lax.reduce_window(out, -jnp.inf, lax.max, win, win, 'VALID')
    return out


# ---------------------------------------------------------------------------
if __name__ == "__main__":
    key = jax.random.PRNGKey(0)
    k_x, k_w, k_g, k_b, k_m, k_v = jax.random.split(key, 6)

    # ConvBlock(in_channels_num=4, out_channels_num=8, kernel_size=3, pool=1)
    N, Cin, H, W = 2, 4, 16, 16
    Cout, ksize, pool, stride = 8, 3, 1, 1

    x = jax.random.normal(k_x, (N, Cin, H, W), dtype=jnp.float32)
    weight = 0.1 * jax.random.normal(k_w, (Cout, Cin, ksize, ksize), dtype=jnp.float32)
    gamma = 0.5 + jax.random.uniform(k_g, (Cout,), dtype=jnp.float32)
    beta = 0.1 * jax.random.normal(k_b, (Cout,), dtype=jnp.float32)
    run_mean = 0.1 * jax.random.normal(k_m, (Cout,), dtype=jnp.float32)
    run_var = 0.5 + jax.random.uniform(k_v, (Cout,), dtype=jnp.float32)

    out = conv_block_forward(x, weight, gamma, beta, run_mean, run_var,
                             kernel_size=ksize, pool=pool, stride=stride)
    out = jax.block_until_ready(out)

    ref = conv_block_reference(x, weight, gamma, beta, run_mean, run_var,
                               kernel_size=ksize, pool=pool, stride=stride)
    ref = jax.block_until_ready(ref)

    assert out.shape == ref.shape == (N, Cout, H // 2, W // 2), (out.shape, ref.shape)
    assert jnp.allclose(out, ref, atol=5e-2, rtol=5e-2), \
        float(jnp.max(jnp.abs(out - ref)))

    print("KERNEL_OK")
</pallas_src>

<mosaic_0001>
module attributes {stable_mosaic.version = 11 : i64} {
  func.func @kernel(%arg0: i32, %arg1: memref<1x18x18x4xbf16, #tpu.memory_space<vmem>>, %arg2: memref<36x8xbf16, #tpu.memory_space<vmem>>, %arg3: memref<8x1xf32, #tpu.memory_space<vmem>>, %arg4: memref<1x8x128xf32, #tpu.memory_space<vmem>>, %arg5: memref<8x16x8xf32, #tpu.memory_space<vmem>>) attributes {dimension_semantics = [#tpu.dimension_semantics<parallel>], iteration_bounds = array<i64: 2>, scalar_prefetch = 0 : i64, scratch_operands = 1 : i64, tpu.core_type = #tpu.core_type<tc>, window_params = [{transform_indices = @transform_0, window_bounds = array<i64: 1, 18, 18, 4>}, {pipeline_mode = #tpu.pipeline_mode<synchronous>, transform_indices = @transform_1, window_bounds = array<i64: 36, 8>}, {pipeline_mode = #tpu.pipeline_mode<synchronous>, transform_indices = @transform_2, window_bounds = array<i64: 8, 1>}, {transform_indices = @transform_3, window_bounds = array<i64: 1, 8, 128>}]} {
    %c0 = arith.constant 0 : index
    %c0_0 = arith.constant 0 : index
    %c0_1 = arith.constant 0 : index
    %c0_2 = arith.constant 0 : index
    %0 = vector.load %arg1[%c0, %c0_0, %c0_1, %c0_2] : memref<1x18x18x4xbf16, #tpu.memory_space<vmem>>, vector<1x16x16x4xbf16>
    %1 = vector.shape_cast %0 : vector<1x16x16x4xbf16> to vector<16x16x4xbf16>
    %2 = vector.shape_cast %1 : vector<16x16x4xbf16> to vector<256x4xbf16>
    %c0_3 = arith.constant 0 : index
    %c0_4 = arith.constant 0 : index
    %c1 = arith.constant 1 : index
    %c0_5 = arith.constant 0 : index
    %3 = vector.load %arg1[%c0_3, %c0_4, %c1, %c0_5] : memref<1x18x18x4xbf16, #tpu.memory_space<vmem>>, vector<1x16x16x4xbf16>
    %4 = vector.shape_cast %3 : vector<1x16x16x4xbf16> to vector<16x16x4xbf16>
    %5 = vector.shape_cast %4 : vector<16x16x4xbf16> to vector<256x4xbf16>
    %c0_6 = arith.constant 0 : index
    %c0_7 = arith.constant 0 : index
    %c2 = arith.constant 2 : index
    %c0_8 = arith.constant 0 : index
    %6 = vector.load %arg1[%c0_6, %c0_7, %c2, %c0_8] : memref<1x18x18x4xbf16, #tpu.memory_space<vmem>>, vector<1x16x16x4xbf16>
    %7 = vector.shape_cast %6 : vector<1x16x16x4xbf16> to vector<16x16x4xbf16>
    %8 = vector.shape_cast %7 : vector<16x16x4xbf16> to vector<256x4xbf16>
    %c0_9 = arith.constant 0 : index
    %c1_10 = arith.constant 1 : index
    %c0_11 = arith.constant 0 : index
    %c0_12 = arith.constant 0 : index
    %9 = vector.load %arg1[%c0_9, %c1_10, %c0_11, %c0_12] : memref<1x18x18x4xbf16, #tpu.memory_space<vmem>>, vector<1x16x16x4xbf16>
    %10 = vector.shape_cast %9 : vector<1x16x16x4xbf16> to vector<16x16x4xbf16>
    %11 = vector.shape_cast %10 : vector<16x16x4xbf16> to vector<256x4xbf16>
    %c0_13 = arith.constant 0 : index
    %c1_14 = arith.constant 1 : index
    %c1_15 = arith.constant 1 : index
    %c0_16 = arith.constant 0 : index
    %12 = vector.load %arg1[%c0_13, %c1_14, %c1_15, %c0_16] : memref<1x18x18x4xbf16, #tpu.memory_space<vmem>>, vector<1x16x16x4xbf16>
    %13 = vector.shape_cast %12 : vector<1x16x16x4xbf16> to vector<16x16x4xbf16>
    %14 = vector.shape_cast %13 : vector<16x16x4xbf16> to vector<256x4xbf16>
    %c0_17 = arith.constant 0 : index
    %c1_18 = arith.constant 1 : index
    %c2_19 = arith.constant 2 : index
    %c0_20 = arith.constant 0 : index
    %15 = vector.load %arg1[%c0_17, %c1_18, %c2_19, %c0_20] : memref<1x18x18x4xbf16, #tpu.memory_space<vmem>>, vector<1x16x16x4xbf16>
    %16 = vector.shape_cast %15 : vector<1x16x16x4xbf16> to vector<16x16x4xbf16>
    %17 = vector.shape_cast %16 : vector<16x16x4xbf16> to vector<256x4xbf16>
    %c0_21 = arith.constant 0 : index
    %c2_22 = arith.constant 2 : index
    %c0_23 = arith.constant 0 : index
    %c0_24 = arith.constant 0 : index
    %18 = vector.load %arg1[%c0_21, %c2_22, %c0_23, %c0_24] : memref<1x18x18x4xbf16, #tpu.memory_space<vmem>>, vector<1x16x16x4xbf16>
    %19 = vector.shape_cast %18 : vector<1x16x16x4xbf16> to vector<16x16x4xbf16>
    %20 = vector.shape_cast %19 : vector<16x16x4xbf16> to vector<256x4xbf16>
    %c0_25 = arith.constant 0 : index
    %c2_26 = arith.constant 2 : index
    %c1_27 = arith.constant 1 : index
    %c0_28 = arith.constant 0 : index
    %21 = vector.load %arg1[%c0_25, %c2_26, %c1_27, %c0_28] : memref<1x18x18x4xbf16, #tpu.memory_space<vmem>>, vector<1x16x16x4xbf16>
    %22 = vector.shape_cast %21 : vector<1x16x16x4xbf16> to vector<16x16x4xbf16>
    %23 = vector.shape_cast %22 : vector<16x16x4xbf16> to vector<256x4xbf16>
    %c0_29 = arith.constant 0 : index
    %c2_30 = arith.constant 2 : index
    %c2_31 = arith.constant 2 : index
    %c0_32 = arith.constant 0 : index
    %24 = vector.load %arg1[%c0_29, %c2_30, %c2_31, %c0_32] : memref<1x18x18x4xbf16, #tpu.memory_space<vmem>>, vector<1x16x16x4xbf16>
    %25 = vector.shape_cast %24 : vector<1x16x16x4xbf16> to vector<16x16x4xbf16>
    %26 = vector.shape_cast %25 : vector<16x16x4xbf16> to vector<256x4xbf16>
    %27 = tpu.concatenate %2, %5, %8, %11, %14, %17, %20, %23, %26 in 1 : vector<256x4xbf16>, vector<256x4xbf16>, vector<256x4xbf16>, vector<256x4xbf16>, vector<256x4xbf16>, vector<256x4xbf16>, vector<256x4xbf16>, vector<256x4xbf16>, vector<256x4xbf16> -> vector<256x36xbf16>
    %c0_33 = arith.constant 0 : index
    %c0_34 = arith.constant 0 : index
    %28 = vector.load %arg2[%c0_33, %c0_34] : memref<36x8xbf16, #tpu.memory_space<vmem>>, vector<36x8xbf16>
    %cst = arith.constant dense<0.000000e+00> : vector<256x8xf32>
    %29 = tpu.matmul %27, %28, %cst {dimension_numbers = #tpu.dot_dimension_numbers<[1], [0], [0], [1], [0, 0, 1, 1], [], []>} : vector<256x36xbf16>, vector<36x8xbf16>, vector<256x8xf32> -> vector<256x8xf32>
    %30 = vector.shape_cast %29 : vector<256x8xf32> to vector<8x2x16x8xf32>
    %31 = vector.extract_strided_slice %30 {offsets = [0, 0, 0, 0], sizes = [8, 1, 16, 8], strides = [1, 1, 1, 1]} : vector<8x2x16x8xf32> to vector<8x1x16x8xf32>
    %32 = vector.shape_cast %31 : vector<8x1x16x8xf32> to vector<8x16x8xf32>
    %33 = vector.extract_strided_slice %30 {offsets = [0, 1, 0, 0], sizes = [8, 1, 16, 8], strides = [1, 1, 1, 1]} : vector<8x2x16x8xf32> to vector<8x1x16x8xf32>
    %34 = vector.shape_cast %33 : vector<8x1x16x8xf32> to vector<8x16x8xf32>
    %35 = arith.maximumf %32, %34 : vector<8x16x8xf32>
    %c0_35 = arith.constant 0 : index
    %c0_36 = arith.constant 0 : index
    %c0_37 = arith.constant 0 : index
    %36 = vector.load %arg5[%c0_35, %c0_36, %c0_37] : memref<8x16x8xf32, #tpu.memory_space<vmem>>, vector<8x16x8xf32>
    tpu.vector_store %arg5[%c0_35, %c0_36, %c0_37], %35 {strides = array<i32>} : memref<8x16x8xf32, #tpu.memory_space<vmem>>, vector<8x16x8xf32>,
    %c0_38 = arith.constant 0 : index
    %c0_39 = arith.constant 0 : index
    %c0_40 = arith.constant 0 : index
    %37 = tpu.strided_load %arg5[%c0_38, %c0_39, %c0_40] {strides = array<i32: 1, 2, 1>} : memref<8x16x8xf32, #tpu.memory_space<vmem>>, vector<8x8x8xf32>
    %c0_41 = arith.constant 0 : index
    %c1_42 = arith.constant 1 : index
    %c0_43 = arith.constant 0 : index
    %38 = tpu.strided_load %arg5[%c0_41, %c1_42, %c0_43] {strides = array<i32: 1, 2, 1>} : memref<8x16x8xf32, #tpu.memory_space<vmem>>, vector<8x8x8xf32>
    %39 = arith.maximumf %37, %38 : vector<8x8x8xf32>
    %40 = vector.shape_cast %39 : vector<8x8x8xf32> to vector<64x8xf32>
    %cst_44 = arith.constant 0.000000e+00 : f32
    %41 = vector.broadcast %cst_44 : f32 to vector<64x8xf32>
    %42 = tpu.concatenate %40, %41 in 0 : vector<64x8xf32>, vector<64x8xf32> -> vector<128x8xf32>
    %43 = tpu.transpose %42, [1, 0] : vector<128x8xf32> -> vector<8x128xf32>
    %c0_45 = arith.constant 0 : index
    %c0_46 = arith.constant 0 : index
    %44 = vector.load %arg3[%c0_45, %c0_46] : memref<8x1xf32, #tpu.memory_space<vmem>>, vector<8x1xf32>
    %45 = vector.broadcast %44 : vector<8x1xf32> to vector<8x128xf32>
    %46 = arith.addf %43, %45 : vector<8x128xf32>
    %cst_47 = arith.constant 1.000000e-01 : f32
    %47 = vector.broadcast %cst_47 : f32 to vector<8x128xf32>
    %48 = arith.mulf %47, %46 : vector<8x128xf32>
    %49 = arith.maximumf %46, %48 : vector<8x128xf32>
    %c0_48 = arith.constant 0 : index
    %c0_49 = arith.constant 0 : index
    %c0_50 = arith.constant 0 : index
    %50 = vector.load %arg4[%c0_48, %c0_49, %c0_50] : memref<1x8x128xf32, #tpu.memory_space<vmem>>, vector<1x8x128xf32>
    %51 = vector.shape_cast %50 : vector<1x8x128xf32> to vector<8x128xf32>
    %52 = vector.shape_cast %49 : vector<8x128xf32> to vector<1x8x128xf32>
    tpu.vector_store %arg4[%c0_48, %c0_49, %c0_50], %52 {strides = array<i32>} : memref<1x8x128xf32, #tpu.memory_space<vmem>>, vector<1x8x128xf32>,
    return
  }
  func.func @transform_0(%arg0: i32) -> (i32, i32, i32, i32) {
    %c0_i32 = arith.constant 0 : i32
    %c0_i32_0 = arith.constant 0 : i32
    %c0_i32_1 = arith.constant 0 : i32
    %c0_i32_2 = arith.constant 0 : i32
    return %arg0, %c0_i32, %c0_i32_0, %c0_i32_1 : i32, i32, i32, i32
  }
  func.func @transform_1(%arg0: i32) -> (i32, i32) {
    %c0_i32 = arith.constant 0 : i32
    %c0_i32_0 = arith.constant 0 : i32
    %c0_i32_1 = arith.constant 0 : i32
    return %c0_i32, %c0_i32_0 : i32, i32
  }
  func.func @transform_2(%arg0: i32) -> (i32, i32) {
    %c0_i32 = arith.constant 0 : i32
    %c0_i32_0 = arith.constant 0 : i32
    %c0_i32_1 = arith.constant 0 : i32
    return %c0_i32, %c0_i32_0 : i32, i32
  }
  func.func @transform_3(%arg0: i32) -> (i32, i32, i32) {
    %c0_i32 = arith.constant 0 : i32
    %c0_i32_0 = arith.constant 0 : i32
    %c0_i32_1 = arith.constant 0 : i32
    return %arg0, %c0_i32, %c0_i32_0 : i32, i32, i32
  }
}

</mosaic_0001>

<llo_original>
// kernel: tpu_custom_call.1
$region0: #{tpu_custom_call.1}
  #allocation0 [shape = 'u32[]', space=smem, size = 0x4, offset = 0x4, fixed_abs, tag = 'smem constant byte address 0x4 - core index']
  #allocation1 [shape = 'u32[144,128]{1,0:T(1,128)}', space=vmem, size = 0x12000, scoped, tag = 'internal scratch']
  #allocation2 [shape = 'f32[8,16,8]{2,1,0:T(8,128)}', space=vmem, size = 0x10000, scoped, tag = 'scratch operand']
  %s0 = inlined_call_operand.vmem [shape: bf16[2,18,18,4], index: 0, kind: input, shape index: {}]
  %s1 = inlined_call_operand.vmem [shape: bf16[36,8], index: 1, kind: input, shape index: {}]
  %s2 = inlined_call_operand.vmem [shape: f32[8,1], index: 2, kind: input, shape index: {}]
  %s3 = inlined_call_operand.hbm [shape: f32[2,8,128], index: 3, kind: output, shape index: {}]
  %s4 = sld [smem:[#allocation0]]
  $region45: #{tpu_custom_call.1} parent=0
    _
  %s6 = ssub.s32 1, %s4
  %s7 = scalar_select 0, %s6, %s4
  $region1: #{tpu_custom_call.1} parent=0
    #allocation3 [shape = 'u8[8192]{0}', space=vmem, size = 0x2000, scoped, tag = 'output window, operand 0']
    #allocation4 [shape = 's32[2]{0}', space=sflag, size = 0x8, scoped, tag = 'scoped memory for tpu_custom_call.1']
    %8 = vsyncpa [#allocation4], 0
    %s9 = scalar_lea.sflag [#allocation4], 1
    %10 = vsyncpa %s9, 0
    loop: start=0, step=1, limit=4
    $region2: #{tpu_custom_call.1} parent=1 // loop_pre_header
      _
    $region3: #{tpu_custom_call.1} parent=1 // loop_header
      %s12 = sphi 0, %s16
      %p13 = scmp.ge.s32.totalorder %s12, 4
      %s22 = sphi 0, %s24
      %s25 = sphi 0, %s22
      %s26 = sphi 0, %s25
      %s42 = sphi 0, %s26
      %s46 = sphi 0, %s46
      %s48 = sphi 0, %s46
      %s49 = sphi 0, %s48
      %s63 = sphi 0, %s49
      %s67 = sphi 0, %s67
      %s69 = sphi 0, %s67
      %s70 = sphi 0, %s69
      %s84 = sphi 0, %s70
      %s90 = sphi 0, %s92
      %s93 = sphi 0, %s90
      %s94 = sphi 0, %s93
      %s110 = sphi 0, %s94
    $region4: #{tpu_custom_call.1} parent=1 // loop_header_branch
      %15 = sbr.rel (%p13) target = $region8
    $region5: #{tpu_custom_call.1} parent=1 // loop_body
      %s17 = ssub.s32 %s12, 1
      %s18 = ssub.s32 %s12, 2
      %s19 = sadd.s32 %s12, 1
      %s20 = ssub.s32 %s12, %s19
      %p21 = scmp.eq.s32.totalorder %s20, 0
      %s23 = sadd.s32 %s22, 1
      %s24 = scalar_select %p21, %s22, %s23
      %p27 = pneg %p21
      %p28 = scmp.eq.s32.totalorder %s12, 1
      %p29 = por %p27, %p28
      %p30 = scmp.ne.s32.totalorder %s22, %s25
      %p31 = scmp.eq.s32.totalorder %s12, 0
      %p32 = por %p30, %p31
      %p33 = scmp.ne.s32.totalorder %s22, %s25
      %p34 = scmp.eq.s32.totalorder %s17, 1
      %p35 = por %p33, %p34
      %p36 = scmp.ne.s32.totalorder %s25, %s26
      %p37 = scmp.eq.s32.totalorder %s17, 0
      %p38 = por %p36, %p37
      %p39 = scmp.ne.s32.totalorder %s25, %s26
      %p40 = scmp.eq.s32.totalorder %s18, 1
      %p41 = por %p39, %p40
      %p43 = scmp.ne.s32.totalorder %s26, %s42
      %p44 = scmp.eq.s32.totalorder %s18, 0
      %p45 = por %p43, %p44
      %s47 = sadd.s32 %s46, 1
      %p50 = scmp.eq.s32.totalorder %s12, 1
      %p51 = scmp.ne.s32.totalorder %s46, %s48
      %p52 = scmp.eq.s32.totalorder %s12, 0
      %p53 = por %p51, %p52
      %p54 = scmp.ne.s32.totalorder %s46, %s48
      %p55 = scmp.eq.s32.totalorder %s17, 1
      %p56 = por %p54, %p55
      %p57 = scmp.ne.s32.totalorder %s48, %s49
      %p58 = scmp.eq.s32.totalorder %s17, 0
      %p59 = por %p57, %p58
      %p60 = scmp.ne.s32.totalorder %s48, %s49
      %p61 = scmp.eq.s32.totalorder %s18, 1
      %p62 = por %p60, %p61
      %p64 = scmp.ne.s32.totalorder %s49, %s63
      %p65 = scmp.eq.s32.totalorder %s18, 0
      %p66 = por %p64, %p65
      %s68 = sadd.s32 %s67, 1
      %p71 = scmp.eq.s32.totalorder %s12, 1
      %p72 = scmp.ne.s32.totalorder %s67, %s69
      %p73 = scmp.eq.s32.totalorder %s12, 0
      %p74 = por %p72, %p73
      %p75 = scmp.ne.s32.totalorder %s67, %s69
      %p76 = scmp.eq.s32.totalorder %s17, 1
      %p77 = por %p75, %p76
      %p78 = scmp.ne.s32.totalorder %s69, %s70
      %p79 = scmp.eq.s32.totalorder %s17, 0
      %p80 = por %p78, %p79
      %p81 = scmp.ne.s32.totalorder %s69, %s70
      %p82 = scmp.eq.s32.totalorder %s18, 1
      %p83 = por %p81, %p82
      %p85 = scmp.ne.s32.totalorder %s70, %s84
      %p86 = scmp.eq.s32.totalorder %s18, 0
      %p87 = por %p85, %p86
      %s88 = ssub.s32 %s12, %s19
      %p89 = scmp.eq.s32.totalorder %s88, 0
      %s91 = sadd.s32 %s90, 1
      %s92 = scalar_select %p89, %s90, %s91
      %p95 = pneg %p89
      %p96 = scmp.eq.s32.totalorder %s12, 1
      %p97 = por %p95, %p96
      %p98 = scmp.ne.s32.totalorder %s90, %s93
      %p99 = scmp.eq.s32.totalorder %s12, 0
      %p100 = por %p98, %p99
      %p101 = scmp.ne.s32.totalorder %s90, %s93
      %p102 = scmp.eq.s32.totalorder %s17, 1
      %p103 = por %p101, %p102
      %p104 = scmp.ne.s32.totalorder %s93, %s94
      %p105 = scmp.eq.s32.totalorder %s17, 0
      %p106 = por %p104, %p105
      %p107 = scmp.ne.s32.totalorder %s93, %s94
      %p108 = scmp.eq.s32.totalorder %s18, 1
      %p109 = por %p107, %p108
      %p111 = scmp.ne.s32.totalorder %s94, %s110
      %p112 = scmp.eq.s32.totalorder %s18, 0
      %p113 = por %p111, %p112
      %p114 = scmp.le.s32.totalorder 1, %s12
      %p115 = scmp.lt.s32.totalorder %s12, 3
      %p116 = pnand %p114, %p115
      %p117 = pneg %p116
      // Predicated region
      $region9: #{tpu_custom_call.1} parent=5 // pred_check
        _
      $region10: #{tpu_custom_call.1} parent=5 // pred_check_branch
        %119 = sbr.rel (%p116) target = $region12
      $region11: #{tpu_custom_call.1} parent=5 // pred_region
        %s120 = ssub.s32 %s12, 1
        // Predicated region
        $region13: #{tpu_custom_call.1} parent=11 // pred_check
          %p121 = pneg %p59
        $region14: #{tpu_custom_call.1} parent=11 // pred_check_branch
          %123 = sbr.rel (%p121) target = $region16
        $region15: #{tpu_custom_call.1} parent=11 // pred_region
          _
        $region16: #{tpu_custom_call.1} parent=11 // pred_fallthru
          _
        // Predicated region
        $region17: #{tpu_custom_call.1} parent=11 // pred_check
          %p124 = pneg %p80
        $region18: #{tpu_custom_call.1} parent=11 // pred_check_branch
          %126 = sbr.rel (%p124) target = $region20
        $region19: #{tpu_custom_call.1} parent=11 // pred_region
          _
        $region20: #{tpu_custom_call.1} parent=11 // pred_fallthru
          _
      $region12: #{tpu_custom_call.1} parent=5 // pred_fallthru
        _
      %p127 = scmp.lt.s32.totalorder %s12, 2
      // Predicated region
      $region21: #{tpu_custom_call.1} parent=5 // pred_check
        %p128 = pneg %p127
      $region22: #{tpu_custom_call.1} parent=5 // pred_check_branch
        %130 = sbr.rel (%p128) target = $region24
      $region23: #{tpu_custom_call.1} parent=5 // pred_region
        // Predicated region
        $region25: #{tpu_custom_call.1} parent=23 // pred_check
          %p131 = pneg %p32
        $region26: #{tpu_custom_call.1} parent=23 // pred_check_branch
          %133 = sbr.rel (%p131) target = $region28
        $region27: #{tpu_custom_call.1} parent=23 // pred_region
          %p134 = scmp.lt.s32.totalorder %s12, 1
          %s135 = scalar_select %p134, %s12, 1
          %s136 = smul.addr %s135, 54
          %s137 = smul.addr %s136, 4
          %s138 = scalar_lea.vmem %s0, %s137
        $region28: #{tpu_custom_call.1} parent=23 // pred_fallthru
          _
      $region24: #{tpu_custom_call.1} parent=5 // pred_fallthru
        _
      %p139 = scmp.le.s32.totalorder 1, %s12
      %p140 = scmp.lt.s32.totalorder %s12, 3
      %p141 = pnand %p139, %p140
      %p142 = pneg %p141
      // Predicated region
      $region29: #{tpu_custom_call.1} parent=5 // pred_check
        _
      $region30: #{tpu_custom_call.1} parent=5 // pred_check_branch
        %144 = sbr.rel (%p141) target = $region32
      $region31: #{tpu_custom_call.1} parent=5 // pred_region
        %s145 = ssub.s32 %s12, 1
        %p146 = scmp.lt.s32.totalorder %s17, 1
        %s147 = scalar_select %p146, %s17, 1
        %s148 = smul.addr %s147, 54
        %s149 = smul.addr %s148, 4
        %s150 = scalar_lea.vmem %s0, %s149
        %p151 = pneg %p38
        %p152 = pneg %p35
        %p153 = pneg %p59
        %p154 = pneg %p56
        %p155 = pneg %p80
        %p156 = pneg %p77
        %p157 = pneg %p106
        %p158 = pneg %p103
        %s159 = sand.u32 %s93, 1
        %s160 = scalar_lea.sflag [#allocation4], %s159
        %s161 = sand.u32 %s93, 1
        %s162 = smul.addr %s161, 8
        %s163 = scalar_lea.vmem [#allocation3], %s162
        %p164 = scmp.lt.s32.totalorder %s17, 1
        %s165 = scalar_select %p164, %s17, 1
        %s166 = smul.addr %s165, 54
        %s167 = smul.addr %s166, 4
        %s168 = scalar_lea.vmem %s0, %s167
        %v170 = vld [vmem:[%s168] sm:$0xf]
        %v171 = vld [vmem:[%s168 + $0x4] sm:$0xf]
        %v172 = vld [vmem:[%s168 + $0xc] sm:$0xf]
        %v173 = vld [vmem:[%s168 + $0x10] sm:$0xf]
        %v174 = vld [vmem:[%s168 + $0x18] sm:$0xf]
        %v175 = vld [vmem:[%s168 + $0x1c] sm:$0xf]
        %v176 = vld [vmem:[%s168 + $0x24] sm:$0xf]
        %v177 = vld [vmem:[%s168 + $0x28] sm:$0xf]
        %v178 = vld [vmem:[%s168 + $0x30] sm:$0xf]
        %v179 = vld [vmem:[%s168 + $0x34] sm:$0xf]
        %v180 = vld [vmem:[%s168 + $0x3c] sm:$0xf]
        %v181 = vld [vmem:[%s168 + $0x40] sm:$0xf]
        %v182 = vld [vmem:[%s168 + $0x48] sm:$0xf]
        %v183 = vld [vmem:[%s168 + $0x4c] sm:$0xf]
        %v184 = vld [vmem:[%s168 + $0x54] sm:$0xf]
        %v185 = vld [vmem:[%s168 + $0x58] sm:$0xf]
        %v186 = vld [vmem:[%s168 + $0x60] sm:$0xf]
        %v187 = vld [vmem:[%s168 + $0x64] sm:$0xf]
        %v188 = vld [vmem:[%s168 + $0x6c] sm:$0xf]
        %v189 = vld [vmem:[%s168 + $0x70] sm:$0xf]
        %v190 = vld [vmem:[%s168 + $0x78] sm:$0xf]
        %v191 = vld [vmem:[%s168 + $0x7c] sm:$0xf]
        %v192 = vld [vmem:[%s168 + $0x84] sm:$0xf]
        %v193 = vld [vmem:[%s168 + $0x88] sm:$0xf]
        %v194 = vld [vmem:[%s168 + $0x90] sm:$0xf]
        %v195 = vld [vmem:[%s168 + $0x94] sm:$0xf]
        %v196 = vld [vmem:[%s168 + $0x9c] sm:$0xf]
        %v197 = vld [vmem:[%s168 + $0xa0] sm:$0xf]
        %v198 = vld [vmem:[%s168 + $0xa8] sm:$0xf]
        %v199 = vld [vmem:[%s168 + $0xac] sm:$0xf]
        %v200 = vld [vmem:[%s168 + $0xb4] sm:$0xf]
        %v201 = vld [vmem:[%s168 + $0xb8] sm:$0xf]
        %v202 = vld [vmem:[%s168 + $0x8] sm:$0x1]
        %v203 = vld [vmem:[%s168 + $0x14] sm:$0x1]
        %v204 = vld [vmem:[%s168 + $0x20] sm:$0x1]
        %v205 = vld [vmem:[%s168 + $0x2c] sm:$0x1]
        %v206 = vld [vmem:[%s168 + $0x38] sm:$0x1]
        %v207 = vld [vmem:[%s168 + $0x44] sm:$0x1]
        %v208 = vld [vmem:[%s168 + $0x50] sm:$0x1]
        %v209 = vld [vmem:[%s168 + $0x5c] sm:$0x1]
        %v210 = vld [vmem:[%s168 + $0x68] sm:$0x1]
        %v211 = vld [vmem:[%s168 + $0x74] sm:$0x1]
        %v212 = vld [vmem:[%s168 + $0x80] sm:$0x1]
        %v213 = vld [vmem:[%s168 + $0x8c] sm:$0x1]
        %v214 = vld [vmem:[%s168 + $0x98] sm:$0x1]
        %v215 = vld [vmem:[%s168 + $0xa4] sm:$0x1]
        %v216 = vld [vmem:[%s168 + $0xb0] sm:$0x1]
        %v217 = vld [vmem:[%s168 + $0xbc] sm:$0x1]
        %vm218 = vsmask.f32 3328
        %vm219 = vsmask.f32 7440
        %vm220 = vmor %vm218, %vm219
        %v222 = vshrl.u32 %v170, 16
        %v224 = vrot.slane %v222, 4
        %v225 = vshll.u32 %v170, 16
        %v227 = vrot.slane %v225, 5
        %v228 = vor.u32 %v224, %v227
        %v229 = vrot.slane %v228, 4
        %v231 = vshll.u32 %v171, 16
        %v233 = vrot.slane %v231, 5
        %v234 = vsel %vm220, %v229, %v233
        %v235 = vshrl.u32 %v171, 16
        %v237 = vrot.slane %v235, 4
        %v238 = vor.u32 %v237, %v233
        %v239 = vrot.slane %v238, 4
        %v241 = vshll.u32 %v202, 16
        %v243 = vrot.slane %v241, 5
        %v244 = vsel %vm220, %v239, %v243
        %v246 = vshrl.u32 %v172, 16
        %v248 = vrot.slane %v246, 4
        %v249 = vshll.u32 %v172, 16
        %v251 = vrot.slane %v249, 5
        %v252 = vor.u32 %v248, %v251
        %v253 = vrot.slane %v252, 4
        %v255 = vshll.u32 %v173, 16
        %v257 = vrot.slane %v255, 5
        %v258 = vsel %vm220, %v253, %v257
        %v259 = vshrl.u32 %v173, 16
        %v261 = vrot.slane %v259, 4
        %v262 = vor.u32 %v261, %v257
        %v263 = vrot.slane %v262, 4
        %v265 = vshll.u32 %v203, 16
        %v267 = vrot.slane %v265, 5
        %v268 = vsel %vm220, %v263, %v267
        %v270 = vshrl.u32 %v174, 16
        %v272 = vrot.slane %v270, 4
        %v273 = vshll.u32 %v174, 16
        %v275 = vrot.slane %v273, 5
        %v276 = vor.u32 %v272, %v275
        %v277 = vrot.slane %v276, 4
        %v279 = vshll.u32 %v175, 16
        %v281 = vrot.slane %v279, 5
        %v282 = vsel %vm220, %v277, %v281
        %v283 = vshrl.u32 %v175, 16
        %v285 = vrot.slane %v283, 4
        %v286 = vor.u32 %v285, %v281
        %v287 = vrot.slane %v286, 4
        %v289 = vshll.u32 %v204, 16
        %v291 = vrot.slane %v289, 5
        %v292 = vsel %vm220, %v287, %v291
        %v294 = vshrl.u32 %v176, 16
        %v296 = vrot.slane %v294, 4
        %v297 = vshll.u32 %v176, 16
        %v299 = vrot.slane %v297, 5
        %v300 = vor.u32 %v296, %v299
        %v301 = vrot.slane %v300, 4
        %v303 = vshll.u32 %v177, 16
        %v305 = vrot.slane %v303, 5
        %v306 = vsel %vm220, %v301, %v305
        %v307 = vshrl.u32 %v177, 16
        %v309 = vrot.slane %v307, 4
        %v310 = vor.u32 %v309, %v305
        %v311 = vrot.slane %v310, 4
        %v313 = vshll.u32 %v205, 16
        %v315 = vrot.slane %v313, 5
        %v316 = vsel %vm220, %v311, %v315
        %v318 = vshrl.u32 %v178, 16
        %v320 = vrot.slane %v318, 4
        %v321 = vshll.u32 %v178, 16
        %v323 = vrot.slane %v321, 5
        %v324 = vor.u32 %v320, %v323
        %v325 = vrot.slane %v324, 4
        %v327 = vshll.u32 %v179, 16
        %v329 = vrot.slane %v327, 5
        %v330 = vsel %vm220, %v325, %v329
        %v331 = vshrl.u32 %v179, 16
        %v333 = vrot.slane %v331, 4
        %v334 = vor.u32 %v333, %v329
        %v335 = vrot.slane %v334, 4
        %v337 = vshll.u32 %v206, 16
        %v339 = vrot.slane %v337, 5
        %v340 = vsel %vm220, %v335, %v339
        %v342 = vshrl.u32 %v180, 16
        %v344 = vrot.slane %v342, 4
        %v345 = vshll.u32 %v180, 16
        %v347 = vrot.slane %v345, 5
        %v348 = vor.u32 %v344, %v347
        %v349 = vrot.slane %v348, 4
        %v351 = vshll.u32 %v181, 16
        %v353 = vrot.slane %v351, 5
        %v354 = vsel %vm220, %v349, %v353
        %v355 = vshrl.u32 %v181, 16
        %v357 = vrot.slane %v355, 4
        %v358 = vor.u32 %v357, %v353
        %v359 = vrot.slane %v358, 4
        %v361 = vshll.u32 %v207, 16
        %v363 = vrot.slane %v361, 5
        %v364 = vsel %vm220, %v359, %v363
        %v366 = vshrl.u32 %v182, 16
        %v368 = vrot.slane %v366, 4
        %v369 = vshll.u32 %v182, 16
        %v371 = vrot.slane %v369, 5
        %v372 = vor.u32 %v368, %v371
        %v373 = vrot.slane %v372, 4
        %v375 = vshll.u32 %v183, 16
        %v377 = vrot.slane %v375, 5
        %v378 = vsel %vm220, %v373, %v377
        %v379 = vshrl.u32 %v183, 16
        %v381 = vrot.slane %v379, 4
        %v382 = vor.u32 %v381, %v377
        %v383 = vrot.slane %v382, 4
        %v385 = vshll.u32 %v208, 16
        %v387 = vrot.slane %v385, 5
        %v388 = vsel %vm220, %v383, %v387
        %v390 = vshrl.u32 %v184, 16
        %v392 = vrot.slane %v390, 4
        %v393 = vshll.u32 %v184, 16
        %v395 = vrot.slane %v393, 5
        %v396 = vor.u32 %v392, %v395
        %v397 = vrot.slane %v396, 4
        %v399 = vshll.u32 %v185, 16
        %v401 = vrot.slane %v399, 5
        %v402 = vsel %vm220, %v397, %v401
        %v403 = vshrl.u32 %v185, 16
        %v405 = vrot.slane %v403, 4
        %v406 = vor.u32 %v405, %v401
        %v407 = vrot.slane %v406, 4
        %v409 = vshll.u32 %v209, 16
        %v411 = vrot.slane %v409, 5
        %v412 = vsel %vm220, %v407, %v411
        %v414 = vshrl.u32 %v186, 16
        %v416 = vrot.slane %v414, 4
        %v417 = vshll.u32 %v186, 16
        %v419 = vrot.slane %v417, 5
        %v420 = vor.u32 %v416, %v419
        %v421 = vrot.slane %v420, 4
        %v423 = vshll.u32 %v187, 16
        %v425 = vrot.slane %v423, 5
        %v426 = vsel %vm220, %v421, %v425
        %v427 = vshrl.u32 %v187, 16
        %v429 = vrot.slane %v427, 4
        %v430 = vor.u32 %v429, %v425
        %v431 = vrot.slane %v430, 4
        %v433 = vshll.u32 %v210, 16
        %v435 = vrot.slane %v433, 5
        %v436 = vsel %vm220, %v431, %v435
        %v438 = vshrl.u32 %v188, 16
        %v440 = vrot.slane %v438, 4
        %v441 = vshll.u32 %v188, 16
        %v443 = vrot.slane %v441, 5
        %v444 = vor.u32 %v440, %v443
        %v445 = vrot.slane %v444, 4
        %v447 = vshll.u32 %v189, 16
        %v449 = vrot.slane %v447, 5
        %v450 = vsel %vm220, %v445, %v449
        %v451 = vshrl.u32 %v189, 16
        %v453 = vrot.slane %v451, 4
        %v454 = vor.u32 %v453, %v449
        %v455 = vrot.slane %v454, 4
        %v457 = vshll.u32 %v211, 16
        %v459 = vrot.slane %v457, 5
        %v460 = vsel %vm220, %v455, %v459
        %v462 = vshrl.u32 %v190, 16
        %v464 = vrot.slane %v462, 4
        %v465 = vshll.u32 %v190, 16
        %v467 = vrot.slane %v465, 5
        %v468 = vor.u32 %v464, %v467
        %v469 = vrot.slane %v468, 4
        %v471 = vshll.u32 %v191, 16
        %v473 = vrot.slane %v471, 5
        %v474 = vsel %vm220, %v469, %v473
        %v475 = vshrl.u32 %v191, 16
        %v477 = vrot.slane %v475, 4
        %v478 = vor.u32 %v477, %v473
        %v479 = vrot.slane %v478, 4
        %v481 = vshll.u32 %v212, 16
        %v483 = vrot.slane %v481, 5
        %v484 = vsel %vm220, %v479, %v483
        %v486 = vshrl.u32 %v192, 16
        %v488 = vrot.slane %v486, 4
        %v489 = vshll.u32 %v192, 16
        %v491 = vrot.slane %v489, 5
        %v492 = vor.u32 %v488, %v491
        %v493 = vrot.slane %v492, 4
        %v495 = vshll.u32 %v193, 16
        %v497 = vrot.slane %v495, 5
        %v498 = vsel %vm220, %v493, %v497
        %v499 = vshrl.u32 %v193, 16
        %v501 = vrot.slane %v499, 4
        %v502 = vor.u32 %v501, %v497
        %v503 = vrot.slane %v502, 4
        %v505 = vshll.u32 %v213, 16
        %v507 = vrot.slane %v505, 5
        %v508 = vsel %vm220, %v503, %v507
        %v510 = vshrl.u32 %v194, 16
        %v512 = vrot.slane %v510, 4
        %v513 = vshll.u32 %v194, 16
        %v515 = vrot.slane %v513, 5
        %v516 = vor.u32 %v512, %v515
        %v517 = vrot.slane %v516, 4
        %v519 = vshll.u32 %v195, 16
        %v521 = vrot.slane %v519, 5
        %v522 = vsel %vm220, %v517, %v521
        %v523 = vshrl.u32 %v195, 16
        %v525 = vrot.slane %v523, 4
        %v526 = vor.u32 %v525, %v521
        %v527 = vrot.slane %v526, 4
        %v529 = vshll.u32 %v214, 16
        %v531 = vrot.slane %v529, 5
        %v532 = vsel %vm220, %v527, %v531
        %v534 = vshrl.u32 %v196, 16
        %v536 = vrot.slane %v534, 4
        %v537 = vshll.u32 %v196, 16
        %v539 = vrot.slane %v537, 5
        %v540 = vor.u32 %v536, %v539
        %v541 = vrot.slane %v540, 4
        %v543 = vshll.u32 %v197, 16
        %v545 = vrot.slane %v543, 5
        %v546 = vsel %vm220, %v541, %v545
        %v547 = vshrl.u32 %v197, 16
        %v549 = vrot.slane %v547, 4
        %v550 = vor.u32 %v549, %v545
        %v551 = vrot.slane %v550, 4
        %v553 = vshll.u32 %v215, 16
        %v555 = vrot.slane %v553, 5
        %v556 = vsel %vm220, %v551, %v555
        %v558 = vshrl.u32 %v198, 16
        %v560 = vrot.slane %v558, 4
        %v561 = vshll.u32 %v198, 16
        %v563 = vrot.slane %v561, 5
        %v564 = vor.u32 %v560, %v563
        %v565 = vrot.slane %v564, 4
        %v567 = vshll.u32 %v199, 16
        %v569 = vrot.slane %v567, 5
        %v570 = vsel %vm220, %v565, %v569
        %v571 = vshrl.u32 %v199, 16
        %v573 = vrot.slane %v571, 4
        %v574 = vor.u32 %v573, %v569
        %v575 = vrot.slane %v574, 4
        %v577 = vshll.u32 %v216, 16
        %v579 = vrot.slane %v577, 5
        %v580 = vsel %vm220, %v575, %v579
        %v582 = vshrl.u32 %v200, 16
        %v584 = vrot.slane %v582, 4
        %v585 = vshll.u32 %v200, 16
        %v587 = vrot.slane %v585, 5
        %v588 = vor.u32 %v584, %v587
        %v589 = vrot.slane %v588, 4
        %v591 = vshll.u32 %v201, 16
        %v593 = vrot.slane %v591, 5
        %v594 = vsel %vm220, %v589, %v593
        %v595 = vshrl.u32 %v201, 16
        %v597 = vrot.slane %v595, 4
        %v598 = vor.u32 %v597, %v593
        %v599 = vrot.slane %v598, 4
        %v601 = vshll.u32 %v217, 16
        %v603 = vrot.slane %v601, 5
        %v604 = vsel %vm220, %v599, %v603
        %v605 = vld [vmem:[%s168] sm:$0xe]
        %v606 = vld [vmem:[%s168 + $0xc] sm:$0xe]
        %v607 = vld [vmem:[%s168 + $0x18] sm:$0xe]
        %v608 = vld [vmem:[%s168 + $0x24] sm:$0xe]
        %v609 = vld [vmem:[%s168 + $0x30] sm:$0xe]
        %v610 = vld [vmem:[%s168 + $0x3c] sm:$0xe]
        %v611 = vld [vmem:[%s168 + $0x48] sm:$0xe]
        %v612 = vld [vmem:[%s168 + $0x54] sm:$0xe]
        %v613 = vld [vmem:[%s168 + $0x60] sm:$0xe]
        %v614 = vld [vmem:[%s168 + $0x6c] sm:$0xe]
        %v615 = vld [vmem:[%s168 + $0x78] sm:$0xe]
        %v616 = vld [vmem:[%s168 + $0x84] sm:$0xe]
        %v617 = vld [vmem:[%s168 + $0x90] sm:$0xe]
        %v618 = vld [vmem:[%s168 + $0x9c] sm:$0xe]
        %v619 = vld [vmem:[%s168 + $0xa8] sm:$0xe]
        %v620 = vld [vmem:[%s168 + $0xb4] sm:$0xe]
        %vm669 = vcmask 1042432
        %vm670 = vcmask 1046532
        %vm671 = vmor %vm669, %vm670
        %v672 = vrot.slane %v605, 5
        %v673 = vrot.slane %v672, 4
        %v674 = vrot.slane %v171, 5
        %v675 = vsel %vm671, %v673, %v674
        %v676 = vrot.slane %v674, 4
        %v677 = vrot.slane %v202, 5
        %v678 = vsel %vm671, %v676, %v677
        %v679 = vrot.slane %v606, 5
        %v680 = vrot.slane %v679, 4
        %v681 = vrot.slane %v173, 5
        %v682 = vsel %vm671, %v680, %v681
        %v683 = vrot.slane %v681, 4
        %v684 = vrot.slane %v203, 5
        %v685 = vsel %vm671, %v683, %v684
        %v686 = vrot.slane %v607, 5
        %v687 = vrot.slane %v686, 4
        %v688 = vrot.slane %v175, 5
        %v689 = vsel %vm671, %v687, %v688
        %v690 = vrot.slane %v688, 4
        %v691 = vrot.slane %v204, 5
        %v692 = vsel %vm671, %v690, %v691
        %v693 = vrot.slane %v608, 5
        %v694 = vrot.slane %v693, 4
        %v695 = vrot.slane %v177, 5
        %v696 = vsel %vm671, %v694, %v695
        %v697 = vrot.slane %v695, 4
        %v698 = vrot.slane %v205, 5
        %v699 = vsel %vm671, %v697, %v698
        %v700 = vrot.slane %v609, 5
        %v701 = vrot.slane %v700, 4
        %v702 = vrot.slane %v179, 5
        %v703 = vsel %vm671, %v701, %v702
        %v704 = vrot.slane %v702, 4
        %v705 = vrot.slane %v206, 5
        %v706 = vsel %vm671, %v704, %v705
        %v707 = vrot.slane %v610, 5
        %v708 = vrot.slane %v707, 4
        %v709 = vrot.slane %v181, 5
        %v710 = vsel %vm671, %v708, %v709
        %v711 = vrot.slane %v709, 4
        %v712 = vrot.slane %v207, 5
        %v713 = vsel %vm671, %v711, %v712
        %v714 = vrot.slane %v611, 5
        %v715 = vrot.slane %v714, 4
        %v716 = vrot.slane %v183, 5
        %v717 = vsel %vm671, %v715, %v716
        %v718 = vrot.slane %v716, 4
        %v719 = vrot.slane %v208, 5
        %v720 = vsel %vm671, %v718, %v719
        %v721 = vrot.slane %v612, 5
        %v722 = vrot.slane %v721, 4
        %v723 = vrot.slane %v185, 5
        %v724 = vsel %vm671, %v722, %v723
        %v725 = vrot.slane %v723, 4
        %v726 = vrot.slane %v209, 5
        %v727 = vsel %vm671, %v725, %v726
        %v728 = vrot.slane %v613, 5
        %v729 = vrot.slane %v728, 4
        %v730 = vrot.slane %v187, 5
        %v731 = vsel %vm671, %v729, %v730
        %v732 = vrot.slane %v730, 4
        %v733 = vrot.slane %v210, 5
        %v734 = vsel %vm671, %v732, %v733
        %v735 = vrot.slane %v614, 5
        %v736 = vrot.slane %v735, 4
        %v737 = vrot.slane %v189, 5
        %v738 = vsel %vm671, %v736, %v737
        %v739 = vrot.slane %v737, 4
        %v740 = vrot.slane %v211, 5
        %v741 = vsel %vm671, %v739, %v740
        %v742 = vrot.slane %v615, 5
        %v743 = vrot.slane %v742, 4
        %v744 = vrot.slane %v191, 5
        %v745 = vsel %vm671, %v743, %v744
        %v746 = vrot.slane %v744, 4
        %v747 = vrot.slane %v212, 5
        %v748 = vsel %vm671, %v746, %v747
        %v749 = vrot.slane %v616, 5
        %v750 = vrot.slane %v749, 4
        %v751 = vrot.slane %v193, 5
        %v752 = vsel %vm671, %v750, %v751
        %v753 = vrot.slane %v751, 4
        %v754 = vrot.slane %v213, 5
        %v755 = vsel %vm671, %v753, %v754
        %v756 = vrot.slane %v617, 5
        %v757 = vrot.slane %v756, 4
        %v758 = vrot.slane %v195, 5
        %v759 = vsel %vm671, %v757, %v758
        %v760 = vrot.slane %v758, 4
        %v761 = vrot.slane %v214, 5
        %v762 = vsel %vm671, %v760, %v761
        %v763 = vrot.slane %v618, 5
        %v764 = vrot.slane %v763, 4
        %v765 = vrot.slane %v197, 5
        %v766 = vsel %vm671, %v764, %v765
        %v767 = vrot.slane %v765, 4
        %v768 = vrot.slane %v215, 5
        %v769 = vsel %vm671, %v767, %v768
        %v770 = vrot.slane %v619, 5
        %v771 = vrot.slane %v770, 4
        %v772 = vrot.slane %v199, 5
        %v773 = vsel %vm671, %v771, %v772
        %v774 = vrot.slane %v772, 4
        %v775 = vrot.slane %v216, 5
        %v776 = vsel %vm671, %v774, %v775
        %v777 = vrot.slane %v620, 5
        %v778 = vrot.slane %v777, 4
        %v779 = vrot.slane %v201, 5
        %v780 = vsel %vm671, %v778, %v779
        %v781 = vrot.slane %v779, 4
        %v782 = vrot.slane %v217, 5
        %v783 = vsel %vm671, %v781, %v782
        %s784 = scalar_lea.vmem %s168, 12
        %v785 = vld [vmem:[%s784] sm:$0xf]
        %v786 = vld [vmem:[%s784 + $0x4] sm:$0xf]
        %v787 = vld [vmem:[%s784 + $0xc] sm:$0xf]
        %v788 = vld [vmem:[%s784 + $0x10] sm:$0xf]
        %v789 = vld [vmem:[%s784 + $0x18] sm:$0xf]
        %v790 = vld [vmem:[%s784 + $0x1c] sm:$0xf]
        %v791 = vld [vmem:[%s784 + $0x24] sm:$0xf]
        %v792 = vld [vmem:[%s784 + $0x28] sm:$0xf]
        %v793 = vld [vmem:[%s784 + $0x30] sm:$0xf]
        %v794 = vld [vmem:[%s784 + $0x34] sm:$0xf]
        %v795 = vld [vmem:[%s784 + $0x3c] sm:$0xf]
        %v796 = vld [vmem:[%s784 + $0x40] sm:$0xf]
        %v797 = vld [vmem:[%s784 + $0x48] sm:$0xf]
        %v798 = vld [vmem:[%s784 + $0x4c] sm:$0xf]
        %v799 = vld [vmem:[%s784 + $0x54] sm:$0xf]
        %v800 = vld [vmem:[%s784 + $0x58] sm:$0xf]
        %v801 = vld [vmem:[%s784 + $0x60] sm:$0xf]
        %v802 = vld [vmem:[%s784 + $0x64] sm:$0xf]
        %v803 = vld [vmem:[%s784 + $0x6c] sm:$0xf]
        %v804 = vld [vmem:[%s784 + $0x70] sm:$0xf]
        %v805 = vld [vmem:[%s784 + $0x78] sm:$0xf]
        %v806 = vld [vmem:[%s784 + $0x7c] sm:$0xf]
        %v807 = vld [vmem:[%s784 + $0x84] sm:$0xf]
        %v808 = vld [vmem:[%s784 + $0x88] sm:$0xf]
        %v809 = vld [vmem:[%s784 + $0x90] sm:$0xf]
        %v810 = vld [vmem:[%s784 + $0x94] sm:$0xf]
        %v811 = vld [vmem:[%s784 + $0x9c] sm:$0xf]
        %v812 = vld [vmem:[%s784 + $0xa0] sm:$0xf]
        %v813 = vld [vmem:[%s784 + $0xa8] sm:$0xf]
        %v814 = vld [vmem:[%s784 + $0xac] sm:$0xf]
        %v815 = vld [vmem:[%s784 + $0xb4] sm:$0xf]
        %v816 = vld [vmem:[%s784 + $0xb8] sm:$0xf]
        %v817 = vld [vmem:[%s784 + $0x8] sm:$0x1]
        %v818 = vld [vmem:[%s784 + $0x14] sm:$0x1]
        %v819 = vld [vmem:[%s784 + $0x20] sm:$0x1]
        %v820 = vld [vmem:[%s784 + $0x2c] sm:$0x1]
        %v821 = vld [vmem:[%s784 + $0x38] sm:$0x1]
        %v822 = vld [vmem:[%s784 + $0x44] sm:$0x1]
        %v823 = vld [vmem:[%s784 + $0x50] sm:$0x1]
        %v824 = vld [vmem:[%s784 + $0x5c] sm:$0x1]
        %v825 = vld [vmem:[%s784 + $0x68] sm:$0x1]
        %v826 = vld [vmem:[%s784 + $0x74] sm:$0x1]
        %v827 = vld [vmem:[%s784 + $0x80] sm:$0x1]
        %v828 = vld [vmem:[%s784 + $0x8c] sm:$0x1]
        %v829 = vld [vmem:[%s784 + $0x98] sm:$0x1]
        %v830 = vld [vmem:[%s784 + $0xa4] sm:$0x1]
        %v831 = vld [vmem:[%s784 + $0xb0] sm:$0x1]
        %v832 = vld [vmem:[%s784 + $0xbc] sm:$0x1]
        %v834 = vshrl.u32 %v785, 16
        %v836 = vrot.slane %v834, 4
        %v837 = vshll.u32 %v785, 16
        %v839 = vrot.slane %v837, 5
        %v840 = vor.u32 %v836, %v839
        %v841 = vrot.slane %v840, 4
        %v843 = vshll.u32 %v786, 16
        %v845 = vrot.slane %v843, 5
        %v846 = vsel %vm220, %v841, %v845
        %v847 = vshrl.u32 %v786, 16
        %v849 = vrot.slane %v847, 4
        %v850 = vor.u32 %v849, %v845
        %v851 = vrot.slane %v850, 4
        %v853 = vshll.u32 %v817, 16
        %v855 = vrot.slane %v853, 5
        %v856 = vsel %vm220, %v851, %v855
        %v858 = vshrl.u32 %v787, 16
        %v860 = vrot.slane %v858, 4
        %v861 = vshll.u32 %v787, 16
        %v863 = vrot.slane %v861, 5
        %v864 = vor.u32 %v860, %v863
        %v865 = vrot.slane %v864, 4
        %v867 = vshll.u32 %v788, 16
        %v869 = vrot.slane %v867, 5
        %v870 = vsel %vm220, %v865, %v869
        %v871 = vshrl.u32 %v788, 16
        %v873 = vrot.slane %v871, 4
        %v874 = vor.u32 %v873, %v869
        %v875 = vrot.slane %v874, 4
        %v877 = vshll.u32 %v818, 16
        %v879 = vrot.slane %v877, 5
        %v880 = vsel %vm220, %v875, %v879
        %v882 = vshrl.u32 %v789, 16
        %v884 = vrot.slane %v882, 4
        %v885 = vshll.u32 %v789, 16
        %v887 = vrot.slane %v885, 5
        %v888 = vor.u32 %v884, %v887
        %v889 = vrot.slane %v888, 4
        %v891 = vshll.u32 %v790, 16
        %v893 = vrot.slane %v891, 5
        %v894 = vsel %vm220, %v889, %v893
        %v895 = vshrl.u32 %v790, 16
        %v897 = vrot.slane %v895, 4
        %v898 = vor.u32 %v897, %v893
        %v899 = vrot.slane %v898, 4
        %v901 = vshll.u32 %v819, 16
        %v903 = vrot.slane %v901, 5
        %v904 = vsel %vm220, %v899, %v903
        %v906 = vshrl.u32 %v791, 16
        %v908 = vrot.slane %v906, 4
        %v909 = vshll.u32 %v791, 16
        %v911 = vrot.slane %v909, 5
        %v912 = vor.u32 %v908, %v911
        %v913 = vrot.slane %v912, 4
        %v915 = vshll.u32 %v792, 16
        %v917 = vrot.slane %v915, 5
        %v918 = vsel %vm220, %v913, %v917
        %v919 = vshrl.u32 %v792, 16
        %v921 = vrot.slane %v919, 4
        %v922 = vor.u32 %v921, %v917
        %v923 = vrot.slane %v922, 4
        %v925 = vshll.u32 %v820, 16
        %v927 = vrot.slane %v925, 5
        %v928 = vsel %vm220, %v923, %v927
        %v930 = vshrl.u32 %v793, 16
        %v932 = vrot.slane %v930, 4
        %v933 = vshll.u32 %v793, 16
        %v935 = vrot.slane %v933, 5
        %v936 = vor.u32 %v932, %v935
        %v937 = vrot.slane %v936, 4
        %v939 = vshll.u32 %v794, 16
        %v941 = vrot.slane %v939, 5
        %v942 = vsel %vm220, %v937, %v941
        %v943 = vshrl.u32 %v794, 16
        %v945 = vrot.slane %v943, 4
        %v946 = vor.u32 %v945, %v941
        %v947 = vrot.slane %v946, 4
        %v949 = vshll.u32 %v821, 16
        %v951 = vrot.slane %v949, 5
        %v952 = vsel %vm220, %v947, %v951
        %v954 = vshrl.u32 %v795, 16
        %v956 = vrot.slane %v954, 4
        %v957 = vshll.u32 %v795, 16
        %v959 = vrot.slane %v957, 5
        %v960 = vor.u32 %v956, %v959
        %v961 = vrot.slane %v960, 4
        %v963 = vshll.u32 %v796, 16
        %v965 = vrot.slane %v963, 5
        %v966 = vsel %vm220, %v961, %v965
        %v967 = vshrl.u32 %v796, 16
        %v969 = vrot.slane %v967, 4
        %v970 = vor.u32 %v969, %v965
        %v971 = vrot.slane %v970, 4
        %v973 = vshll.u32 %v822, 16
        %v975 = vrot.slane %v973, 5
        %v976 = vsel %vm220, %v971, %v975
        %v978 = vshrl.u32 %v797, 16
        %v980 = vrot.slane %v978, 4
        %v981 = vshll.u32 %v797, 16
        %v983 = vrot.slane %v981, 5
        %v984 = vor.u32 %v980, %v983
        %v985 = vrot.slane %v984, 4
        %v987 = vshll.u32 %v798, 16
        %v989 = vrot.slane %v987, 5
        %v990 = vsel %vm220, %v985, %v989
        %v991 = vshrl.u32 %v798, 16
        %v993 = vrot.slane %v991, 4
        %v994 = vor.u32 %v993, %v989
        %v995 = vrot.slane %v994, 4
        %v997 = vshll.u32 %v823, 16
        %v999 = vrot.slane %v997, 5
        %v1000 = vsel %vm220, %v995, %v999
        %v1002 = vshrl.u32 %v799, 16
        %v1004 = vrot.slane %v1002, 4
        %v1005 = vshll.u32 %v799, 16
        %v1007 = vrot.slane %v1005, 5
        %v1008 = vor.u32 %v1004, %v1007
        %v1009 = vrot.slane %v1008, 4
        %v1011 = vshll.u32 %v800, 16
        %v1013 = vrot.slane %v1011, 5
        %v1014 = vsel %vm220, %v1009, %v1013
        %v1015 = vshrl.u32 %v800, 16
        %v1017 = vrot.slane %v1015, 4
        %v1018 = vor.u32 %v1017, %v1013
        %v1019 = vrot.slane %v1018, 4
        %v1021 = vshll.u32 %v824, 16
        %v1023 = vrot.slane %v1021, 5
        %v1024 = vsel %vm220, %v1019, %v1023
        %v1026 = vshrl.u32 %v801, 16
        %v1028 = vrot.slane %v1026, 4
        %v1029 = vshll.u32 %v801, 16
        %v1031 = vrot.slane %v1029, 5
        %v1032 = vor.u32 %v1028, %v1031
        %v1033 = vrot.slane %v1032, 4
        %v1035 = vshll.u32 %v802, 16
        %v1037 = vrot.slane %v1035, 5
        %v1038 = vsel %vm220, %v1033, %v1037
        %v1039 = vshrl.u32 %v802, 16
        %v1041 = vrot.slane %v1039, 4
        %v1042 = vor.u32 %v1041, %v1037
        %v1043 = vrot.slane %v1042, 4
        %v1045 = vshll.u32 %v825, 16
        %v1047 = vrot.slane %v1045, 5
        %v1048 = vsel %vm220, %v1043, %v1047
        %v1050 = vshrl.u32 %v803, 16
        %v1052 = vrot.slane %v1050, 4
        %v1053 = vshll.u32 %v803, 16
        %v1055 = vrot.slane %v1053, 5
        %v1056 = vor.u32 %v1052, %v1055
        %v1057 = vrot.slane %v1056, 4
        %v1059 = vshll.u32 %v804, 16
        %v1061 = vrot.slane %v1059, 5
        %v1062 = vsel %vm220, %v1057, %v1061
        %v1063 = vshrl.u32 %v804, 16
        %v1065 = vrot.slane %v1063, 4
        %v1066 = vor.u32 %v1065, %v1061
        %v1067 = vrot.slane %v1066, 4
        %v1069 = vshll.u32 %v826, 16
        %v1071 = vrot.slane %v1069, 5
        %v1072 = vsel %vm220, %v1067, %v1071
        %v1074 = vshrl.u32 %v805, 16
        %v1076 = vrot.slane %v1074, 4
        %v1077 = vshll.u32 %v805, 16
        %v1079 = vrot.slane %v1077, 5
        %v1080 = vor.u32 %v1076, %v1079
        %v1081 = vrot.slane %v1080, 4
        %v1083 = vshll.u32 %v806, 16
        %v1085 = vrot.slane %v1083, 5
        %v1086 = vsel %vm220, %v1081, %v1085
        %v1087 = vshrl.u32 %v806, 16
        %v1089 = vrot.slane %v1087, 4
        %v1090 = vor.u32 %v1089, %v1085
        %v1091 = vrot.slane %v1090, 4
        %v1093 = vshll.u32 %v827, 16
        %v1095 = vrot.slane %v1093, 5
        %v1096 = vsel %vm220, %v1091, %v1095
        %v1098 = vshrl.u32 %v807, 16
        %v1100 = vrot.slane %v1098, 4
        %v1101 = vshll.u32 %v807, 16
        %v1103 = vrot.slane %v1101, 5
        %v1104 = vor.u32 %v1100, %v1103
        %v1105 = vrot.slane %v1104, 4
        %v1107 = vshll.u32 %v808, 16
        %v1109 = vrot.slane %v1107, 5
        %v1110 = vsel %vm220, %v1105, %v1109
        %v1111 = vshrl.u32 %v808, 16
        %v1113 = vrot.slane %v1111, 4
        %v1114 = vor.u32 %v1113, %v1109
        %v1115 = vrot.slane %v1114, 4
        %v1117 = vshll.u32 %v828, 16
        %v1119 = vrot.slane %v1117, 5
        %v1120 = vsel %vm220, %v1115, %v1119
        %v1122 = vshrl.u32 %v809, 16
        %v1124 = vrot.slane %v1122, 4
        %v1125 = vshll.u32 %v809, 16
        %v1127 = vrot.slane %v1125, 5
        %v1128 = vor.u32 %v1124, %v1127
        %v1129 = vrot.slane %v1128, 4
        %v1131 = vshll.u32 %v810, 16
        %v1133 = vrot.slane %v1131, 5
        %v1134 = vsel %vm220, %v1129, %v1133
        %v1135 = vshrl.u32 %v810, 16
        %v1137 = vrot.slane %v1135, 4
        %v1138 = vor.u32 %v1137, %v1133
        %v1139 = vrot.slane %v1138, 4
        %v1141 = vshll.u32 %v829, 16
        %v1143 = vrot.slane %v1141, 5
        %v1144 = vsel %vm220, %v1139, %v1143
        %v1146 = vshrl.u32 %v811, 16
        %v1148 = vrot.slane %v1146, 4
        %v1149 = vshll.u32 %v811, 16
        %v1151 = vrot.slane %v1149, 5
        %v1152 = vor.u32 %v1148, %v1151
        %v1153 = vrot.slane %v1152, 4
        %v1155 = vshll.u32 %v812, 16
        %v1157 = vrot.slane %v1155, 5
        %v1158 = vsel %vm220, %v1153, %v1157
        %v1159 = vshrl.u32 %v812, 16
        %v1161 = vrot.slane %v1159, 4
        %v1162 = vor.u32 %v1161, %v1157
        %v1163 = vrot.slane %v1162, 4
        %v1165 = vshll.u32 %v830, 16
        %v1167 = vrot.slane %v1165, 5
        %v1168 = vsel %vm220, %v1163, %v1167
        %v1170 = vshrl.u32 %v813, 16
        %v1172 = vrot.slane %v1170, 4
        %v1173 = vshll.u32 %v813, 16
        %v1175 = vrot.slane %v1173, 5
        %v1176 = vor.u32 %v1172, %v1175
        %v1177 = vrot.slane %v1176, 4
        %v1179 = vshll.u32 %v814, 16
        %v1181 = vrot.slane %v1179, 5
        %v1182 = vsel %vm220, %v1177, %v1181
        %v1183 = vshrl.u32 %v814, 16
        %v1185 = vrot.slane %v1183, 4
        %v1186 = vor.u32 %v1185, %v1181
        %v1187 = vrot.slane %v1186, 4
        %v1189 = vshll.u32 %v831, 16
        %v1191 = vrot.slane %v1189, 5
        %v1192 = vsel %vm220, %v1187, %v1191
        %v1194 = vshrl.u32 %v815, 16
        %v1196 = vrot.slane %v1194, 4
        %v1197 = vshll.u32 %v815, 16
        %v1199 = vrot.slane %v1197, 5
        %v1200 = vor.u32 %v1196, %v1199
        %v1201 = vrot.slane %v1200, 4
        %v1203 = vshll.u32 %v816, 16
        %v1205 = vrot.slane %v1203, 5
        %v1206 = vsel %vm220, %v1201, %v1205
        %v1207 = vshrl.u32 %v816, 16
        %v1209 = vrot.slane %v1207, 4
        %v1210 = vor.u32 %v1209, %v1205
        %v1211 = vrot.slane %v1210, 4
        %v1213 = vshll.u32 %v832, 16
        %v1215 = vrot.slane %v1213, 5
        %v1216 = vsel %vm220, %v1211, %v1215
        %v1217 = vld [vmem:[%s784] sm:$0xe]
        %v1218 = vld [vmem:[%s784 + $0xc] sm:$0xe]
        %v1219 = vld [vmem:[%s784 + $0x18] sm:$0xe]
        %v1220 = vld [vmem:[%s784 + $0x24] sm:$0xe]
        %v1221 = vld [vmem:[%s784 + $0x30] sm:$0xe]
        %v1222 = vld [vmem:[%s784 + $0x3c] sm:$0xe]
        %v1223 = vld [vmem:[%s784 + $0x48] sm:$0xe]
        %v1224 = vld [vmem:[%s784 + $0x54] sm:$0xe]
        %v1225 = vld [vmem:[%s784 + $0x60] sm:$0xe]
        %v1226 = vld [vmem:[%s784 + $0x6c] sm:$0xe]
        %v1227 = vld [vmem:[%s784 + $0x78] sm:$0xe]
        %v1228 = vld [vmem:[%s784 + $0x84] sm:$0xe]
        %v1229 = vld [vmem:[%s784 + $0x90] sm:$0xe]
        %v1230 = vld [vmem:[%s784 + $0x9c] sm:$0xe]
        %v1231 = vld [vmem:[%s784 + $0xa8] sm:$0xe]
        %v1232 = vld [vmem:[%s784 + $0xb4] sm:$0xe]
        %v1281 = vrot.slane %v1217, 5
        %v1282 = vrot.slane %v1281, 4
        %v1283 = vrot.slane %v786, 5
        %v1284 = vsel %vm671, %v1282, %v1283
        %v1285 = vrot.slane %v1283, 4
        %v1286 = vrot.slane %v817, 5
        %v1287 = vsel %vm671, %v1285, %v1286
        %v1288 = vrot.slane %v1218, 5
        %v1289 = vrot.slane %v1288, 4
        %v1290 = vrot.slane %v788, 5
        %v1291 = vsel %vm671, %v1289, %v1290
        %v1292 = vrot.slane %v1290, 4
        %v1293 = vrot.slane %v818, 5
        %v1294 = vsel %vm671, %v1292, %v1293
        %v1295 = vrot.slane %v1219, 5
        %v1296 = vrot.slane %v1295, 4
        %v1297 = vrot.slane %v790, 5
        %v1298 = vsel %vm671, %v1296, %v1297
        %v1299 = vrot.slane %v1297, 4
        %v1300 = vrot.slane %v819, 5
        %v1301 = vsel %vm671, %v1299, %v1300
        %v1302 = vrot.slane %v1220, 5
        %v1303 = vrot.slane %v1302, 4
        %v1304 = vrot.slane %v792, 5
        %v1305 = vsel %vm671, %v1303, %v1304
        %v1306 = vrot.slane %v1304, 4
        %v1307 = vrot.slane %v820, 5
        %v1308 = vsel %vm671, %v1306, %v1307
        %v1309 = vrot.slane %v1221, 5
        %v1310 = vrot.slane %v1309, 4
        %v1311 = vrot.slane %v794, 5
        %v1312 = vsel %vm671, %v1310, %v1311
        %v1313 = vrot.slane %v1311, 4
        %v1314 = vrot.slane %v821, 5
        %v1315 = vsel %vm671, %v1313, %v1314
        %v1316 = vrot.slane %v1222, 5
        %v1317 = vrot.slane %v1316, 4
        %v1318 = vrot.slane %v796, 5
        %v1319 = vsel %vm671, %v1317, %v1318
        %v1320 = vrot.slane %v1318, 4
        %v1321 = vrot.slane %v822, 5
        %v1322 = vsel %vm671, %v1320, %v1321
        %v1323 = vrot.slane %v1223, 5
        %v1324 = vrot.slane %v1323, 4
        %v1325 = vrot.slane %v798, 5
        %v1326 = vsel %vm671, %v1324, %v1325
        %v1327 = vrot.slane %v1325, 4
        %v1328 = vrot.slane %v823, 5
        %v1329 = vsel %vm671, %v1327, %v1328
        %v1330 = vrot.slane %v1224, 5
        %v1331 = vrot.slane %v1330, 4
        %v1332 = vrot.slane %v800, 5
        %v1333 = vsel %vm671, %v1331, %v1332
        %v1334 = vrot.slane %v1332, 4
        %v1335 = vrot.slane %v824, 5
        %v1336 = vsel %vm671, %v1334, %v1335
        %v1337 = vrot.slane %v1225, 5
        %v1338 = vrot.slane %v1337, 4
        %v1339 = vrot.slane %v802, 5
        %v1340 = vsel %vm671, %v1338, %v1339
        %v1341 = vrot.slane %v1339, 4
        %v1342 = vrot.slane %v825, 5
        %v1343 = vsel %vm671, %v1341, %v1342
        %v1344 = vrot.slane %v1226, 5
        %v1345 = vrot.slane %v1344, 4
        %v1346 = vrot.slane %v804, 5
        %v1347 = vsel %vm671, %v1345, %v1346
        %v1348 = vrot.slane %v1346, 4
        %v1349 = vrot.slane %v826, 5
        %v1350 = vsel %vm671, %v1348, %v1349
        %v1351 = vrot.slane %v1227, 5
        %v1352 = vrot.slane %v1351, 4
        %v1353 = vrot.slane %v806, 5
        %v1354 = vsel %vm671, %v1352, %v1353
        %v1355 = vrot.slane %v1353, 4
        %v1356 = vrot.slane %v827, 5
        %v1357 = vsel %vm671, %v1355, %v1356
        %v1358 = vrot.slane %v1228, 5
        %v1359 = vrot.slane %v1358, 4
        %v1360 = vrot.slane %v808, 5
        %v1361 = vsel %vm671, %v1359, %v1360
        %v1362 = vrot.slane %v1360, 4
        %v1363 = vrot.slane %v828, 5
        %v1364 = vsel %vm671, %v1362, %v1363
        %v1365 = vrot.slane %v1229, 5
        %v1366 = vrot.slane %v1365, 4
        %v1367 = vrot.slane %v810, 5
        %v1368 = vsel %vm671, %v1366, %v1367
        %v1369 = vrot.slane %v1367, 4
        %v1370 = vrot.slane %v829, 5
        %v1371 = vsel %vm671, %v1369, %v1370
        %v1372 = vrot.slane %v1230, 5
        %v1373 = vrot.slane %v1372, 4
        %v1374 = vrot.slane %v812, 5
        %v1375 = vsel %vm671, %v1373, %v1374
        %v1376 = vrot.slane %v1374, 4
        %v1377 = vrot.slane %v830, 5
        %v1378 = vsel %vm671, %v1376, %v1377
        %v1379 = vrot.slane %v1231, 5
        %v1380 = vrot.slane %v1379, 4
        %v1381 = vrot.slane %v814, 5
        %v1382 = vsel %vm671, %v1380, %v1381
        %v1383 = vrot.slane %v1381, 4
        %v1384 = vrot.slane %v831, 5
        %v1385 = vsel %vm671, %v1383, %v1384
        %v1386 = vrot.slane %v1232, 5
        %v1387 = vrot.slane %v1386, 4
        %v1388 = vrot.slane %v816, 5
        %v1389 = vsel %vm671, %v1387, %v1388
        %v1390 = vrot.slane %v1388, 4
        %v1391 = vrot.slane %v832, 5
        %v1392 = vsel %vm671, %v1390, %v1391
        %s1393 = scalar_lea.vmem %s168, 24
        %v1394 = vld [vmem:[%s1393] sm:$0xf]
        %v1395 = vld [vmem:[%s1393 + $0x4] sm:$0xf]
        %v1396 = vld [vmem:[%s1393 + $0xc] sm:$0xf]
        %v1397 = vld [vmem:[%s1393 + $0x10] sm:$0xf]
        %v1398 = vld [vmem:[%s1393 + $0x18] sm:$0xf]
        %v1399 = vld [vmem:[%s1393 + $0x1c] sm:$0xf]
        %v1400 = vld [vmem:[%s1393 + $0x24] sm:$0xf]
        %v1401 = vld [vmem:[%s1393 + $0x28] sm:$0xf]
        %v1402 = vld [vmem:[%s1393 + $0x30] sm:$0xf]
        %v1403 = vld [vmem:[%s1393 + $0x34] sm:$0xf]
        %v1404 = vld [vmem:[%s1393 + $0x3c] sm:$0xf]
        %v1405 = vld [vmem:[%s1393 + $0x40] sm:$0xf]
        %v1406 = vld [vmem:[%s1393 + $0x48] sm:$0xf]
        %v1407 = vld [vmem:[%s1393 + $0x4c] sm:$0xf]
        %v1408 = vld [vmem:[%s1393 + $0x54] sm:$0xf]
        %v1409 = vld [vmem:[%s1393 + $0x58] sm:$0xf]
        %v1410 = vld [vmem:[%s1393 + $0x60] sm:$0xf]
        %v1411 = vld [vmem:[%s1393 + $0x64] sm:$0xf]
        %v1412 = vld [vmem:[%s1393 + $0x6c] sm:$0xf]
        %v1413 = vld [vmem:[%s1393 + $0x70] sm:$0xf]
        %v1414 = vld [vmem:[%s1393 + $0x78] sm:$0xf]
        %v1415 = vld [vmem:[%s1393 + $0x7c] sm:$0xf]
        %v1416 = vld [vmem:[%s1393 + $0x84] sm:$0xf]
        %v1417 = vld [vmem:[%s1393 + $0x88] sm:$0xf]
        %v1418 = vld [vmem:[%s1393 + $0x90] sm:$0xf]
        %v1419 = vld [vmem:[%s1393 + $0x94] sm:$0xf]
        %v1420 = vld [vmem:[%s1393 + $0x9c] sm:$0xf]
        %v1421 = vld [vmem:[%s1393 + $0xa0] sm:$0xf]
        %v1422 = vld [vmem:[%s1393 + $0xa8] sm:$0xf]
        %v1423 = vld [vmem:[%s1393 + $0xac] sm:$0xf]
        %v1424 = vld [vmem:[%s1393 + $0xb4] sm:$0xf]
        %v1425 = vld [vmem:[%s1393 + $0xb8] sm:$0xf]
        %v1426 = vld [vmem:[%s1393 + $0x8] sm:$0x1]
        %v1427 = vld [vmem:[%s1393 + $0x14] sm:$0x1]
        %v1428 = vld [vmem:[%s1393 + $0x20] sm:$0x1]
        %v1429 = vld [vmem:[%s1393 + $0x2c] sm:$0x1]
        %v1430 = vld [vmem:[%s1393 + $0x38] sm:$0x1]
        %v1431 = vld [vmem:[%s1393 + $0x44] sm:$0x1]
        %v1432 = vld [vmem:[%s1393 + $0x50] sm:$0x1]
        %v1433 = vld [vmem:[%s1393 + $0x5c] sm:$0x1]
        %v1434 = vld [vmem:[%s1393 + $0x68] sm:$0x1]
        %v1435 = vld [vmem:[%s1393 + $0x74] sm:$0x1]
        %v1436 = vld [vmem:[%s1393 + $0x80] sm:$0x1]
        %v1437 = vld [vmem:[%s1393 + $0x8c] sm:$0x1]
        %v1438 = vld [vmem:[%s1393 + $0x98] sm:$0x1]
        %v1439 = vld [vmem:[%s1393 + $0xa4] sm:$0x1]
        %v1440 = vld [vmem:[%s1393 + $0xb0] sm:$0x1]
        %v1441 = vld [vmem:[%s1393 + $0xbc] sm:$0x1]
        %v1443 = vshrl.u32 %v1394, 16
        %v1445 = vrot.slane %v1443, 4
        %v1446 = vshll.u32 %v1394, 16
        %v1448 = vrot.slane %v1446, 5
        %v1449 = vor.u32 %v1445, %v1448
        %v1450 = vrot.slane %v1449, 4
        %v1452 = vshll.u32 %v1395, 16
        %v1454 = vrot.slane %v1452, 5
        %v1455 = vsel %vm220, %v1450, %v1454
        %v1456 = vshrl.u32 %v1395, 16
        %v1458 = vrot.slane %v1456, 4
        %v1459 = vor.u32 %v1458, %v1454
        %v1460 = vrot.slane %v1459, 4
        %v1462 = vshll.u32 %v1426, 16
        %v1464 = vrot.slane %v1462, 5
        %v1465 = vsel %vm220, %v1460, %v1464
        %v1467 = vshrl.u32 %v1396, 16
        %v1469 = vrot.slane %v1467, 4
        %v1470 = vshll.u32 %v1396, 16
        %v1472 = vrot.slane %v1470, 5
        %v1473 = vor.u32 %v1469, %v1472
        %v1474 = vrot.slane %v1473, 4
        %v1476 = vshll.u32 %v1397, 16
        %v1478 = vrot.slane %v1476, 5
        %v1479 = vsel %vm220, %v1474, %v1478
        %v1480 = vshrl.u32 %v1397, 16
        %v1482 = vrot.slane %v1480, 4
        %v1483 = vor.u32 %v1482, %v1478
        %v1484 = vrot.slane %v1483, 4
        %v1486 = vshll.u32 %v1427, 16
        %v1488 = vrot.slane %v1486, 5
        %v1489 = vsel %vm220, %v1484, %v1488
        %v1491 = vshrl.u32 %v1398, 16
        %v1493 = vrot.slane %v1491, 4
        %v1494 = vshll.u32 %v1398, 16
        %v1496 = vrot.slane %v1494, 5
        %v1497 = vor.u32 %v1493, %v1496
        %v1498 = vrot.slane %v1497, 4
        %v1500 = vshll.u32 %v1399, 16
        %v1502 = vrot.slane %v1500, 5
        %v1503 = vsel %vm220, %v1498, %v1502
        %v1504 = vshrl.u32 %v1399, 16
        %v1506 = vrot.slane %v1504, 4
        %v1507 = vor.u32 %v1506, %v1502
        %v1508 = vrot.slane %v1507, 4
        %v1510 = vshll.u32 %v1428, 16
        %v1512 = vrot.slane %v1510, 5
        %v1513 = vsel %vm220, %v1508, %v1512
        %v1515 = vshrl.u32 %v1400, 16
        %v1517 = vrot.slane %v1515, 4
        %v1518 = vshll.u32 %v1400, 16
        %v1520 = vrot.slane %v1518, 5
        %v1521 = vor.u32 %v1517, %v1520
        %v1522 = vrot.slane %v1521, 4
        %v1524 = vshll.u32 %v1401, 16
        %v1526 = vrot.slane %v1524, 5
        %v1527 = vsel %vm220, %v1522, %v1526
        %v1528 = vshrl.u32 %v1401, 16
        %v1530 = vrot.slane %v1528, 4
        %v1531 = vor.u32 %v1530, %v1526
        %v1532 = vrot.slane %v1531, 4
        %v1534 = vshll.u32 %v1429, 16
        %v1536 = vrot.slane %v1534, 5
        %v1537 = vsel %vm220, %v1532, %v1536
        %v1539 = vshrl.u32 %v1402, 16
        %v1541 = vrot.slane %v1539, 4
        %v1542 = vshll.u32 %v1402, 16
        %v1544 = vrot.slane %v1542, 5
        %v1545 = vor.u32 %v1541, %v1544
        %v1546 = vrot.slane %v1545, 4
        %v1548 = vshll.u32 %v1403, 16
        %v1550 = vrot.slane %v1548, 5
        %v1551 = vsel %vm220, %v1546, %v1550
        %v1552 = vshrl.u32 %v1403, 16
        %v1554 = vrot.slane %v1552, 4
        %v1555 = vor.u32 %v1554, %v1550
        %v1556 = vrot.slane %v1555, 4
        %v1558 = vshll.u32 %v1430, 16
        %v1560 = vrot.slane %v1558, 5
        %v1561 = vsel %vm220, %v1556, %v1560
        %v1563 = vshrl.u32 %v1404, 16
        %v1565 = vrot.slane %v1563, 4
        %v1566 = vshll.u32 %v1404, 16
        %v1568 = vrot.slane %v1566, 5
        %v1569 = vor.u32 %v1565, %v1568
        %v1570 = vrot.slane %v1569, 4
        %v1572 = vshll.u32 %v1405, 16
        %v1574 = vrot.slane %v1572, 5
        %v1575 = vsel %vm220, %v1570, %v1574
        %v1576 = vshrl.u32 %v1405, 16
        %v1578 = vrot.slane %v1576, 4
        %v1579 = vor.u32 %v1578, %v1574
        %v1580 = vrot.slane %v1579, 4
        %v1582 = vshll.u32 %v1431, 16
        %v1584 = vrot.slane %v1582, 5
        %v1585 = vsel %vm220, %v1580, %v1584
        %v1587 = vshrl.u32 %v1406, 16
        %v1589 = vrot.slane %v1587, 4
        %v1590 = vshll.u32 %v1406, 16
        %v1592 = vrot.slane %v1590, 5
        %v1593 = vor.u32 %v1589, %v1592
        %v1594 = vrot.slane %v1593, 4
        %v1596 = vshll.u32 %v1407, 16
        %v1598 = vrot.slane %v1596, 5
        %v1599 = vsel %vm220, %v1594, %v1598
        %v1600 = vshrl.u32 %v1407, 16
        %v1602 = vrot.slane %v1600, 4
        %v1603 = vor.u32 %v1602, %v1598
        %v1604 = vrot.slane %v1603, 4
        %v1606 = vshll.u32 %v1432, 16
        %v1608 = vrot.slane %v1606, 5
        %v1609 = vsel %vm220, %v1604, %v1608
        %v1611 = vshrl.u32 %v1408, 16
        %v1613 = vrot.slane %v1611, 4
        %v1614 = vshll.u32 %v1408, 16
        %v1616 = vrot.slane %v1614, 5
        %v1617 = vor.u32 %v1613, %v1616
        %v1618 = vrot.slane %v1617, 4
        %v1620 = vshll.u32 %v1409, 16
        %v1622 = vrot.slane %v1620, 5
        %v1623 = vsel %vm220, %v1618, %v1622
        %v1624 = vshrl.u32 %v1409, 16
        %v1626 = vrot.slane %v1624, 4
        %v1627 = vor.u32 %v1626, %v1622
        %v1628 = vrot.slane %v1627, 4
        %v1630 = vshll.u32 %v1433, 16
        %v1632 = vrot.slane %v1630, 5
        %v1633 = vsel %vm220, %v1628, %v1632
        %v1635 = vshrl.u32 %v1410, 16
        %v1637 = vrot.slane %v1635, 4
        %v1638 = vshll.u32 %v1410, 16
        %v1640 = vrot.slane %v1638, 5
        %v1641 = vor.u32 %v1637, %v1640
        %v1642 = vrot.slane %v1641, 4
        %v1644 = vshll.u32 %v1411, 16
        %v1646 = vrot.slane %v1644, 5
        %v1647 = vsel %vm220, %v1642, %v1646
        %v1648 = vshrl.u32 %v1411, 16
        %v1650 = vrot.slane %v1648, 4
        %v1651 = vor.u32 %v1650, %v1646
        %v1652 = vrot.slane %v1651, 4
        %v1654 = vshll.u32 %v1434, 16
        %v1656 = vrot.slane %v1654, 5
        %v1657 = vsel %vm220, %v1652, %v1656
        %v1659 = vshrl.u32 %v1412, 16
        %v1661 = vrot.slane %v1659, 4
        %v1662 = vshll.u32 %v1412, 16
        %v1664 = vrot.slane %v1662, 5
        %v1665 = vor.u32 %v1661, %v1664
        %v1666 = vrot.slane %v1665, 4
        %v1668 = vshll.u32 %v1413, 16
        %v1670 = vrot.slane %v1668, 5
        %v1671 = vsel %vm220, %v1666, %v1670
        %v1672 = vshrl.u32 %v1413, 16
        %v1674 = vrot.slane %v1672, 4
        %v1675 = vor.u32 %v1674, %v1670
        %v1676 = vrot.slane %v1675, 4
        %v1678 = vshll.u32 %v1435, 16
        %v1680 = vrot.slane %v1678, 5
        %v1681 = vsel %vm220, %v1676, %v1680
        %v1683 = vshrl.u32 %v1414, 16
        %v1685 = vrot.slane %v1683, 4
        %v1686 = vshll.u32 %v1414, 16
        %v1688 = vrot.slane %v1686, 5
        %v1689 = vor.u32 %v1685, %v1688
        %v1690 = vrot.slane %v1689, 4
        %v1692 = vshll.u32 %v1415, 16
        %v1694 = vrot.slane %v1692, 5
        %v1695 = vsel %vm220, %v1690, %v1694
        %v1696 = vshrl.u32 %v1415, 16
        %v1698 = vrot.slane %v1696, 4
        %v1699 = vor.u32 %v1698, %v1694
        %v1700 = vrot.slane %v1699, 4
        %v1702 = vshll.u32 %v1436, 16
        %v1704 = vrot.slane %v1702, 5
        %v1705 = vsel %vm220, %v1700, %v1704
        %v1707 = vshrl.u32 %v1416, 16
        %v1709 = vrot.slane %v1707, 4
        %v1710 = vshll.u32 %v1416, 16
        %v1712 = vrot.slane %v1710, 5
        %v1713 = vor.u32 %v1709, %v1712
        %v1714 = vrot.slane %v1713, 4
        %v1716 = vshll.u32 %v1417, 16
        %v1718 = vrot.slane %v1716, 5
        %v1719 = vsel %vm220, %v1714, %v1718
        %v1720 = vshrl.u32 %v1417, 16
        %v1722 = vrot.slane %v1720, 4
        %v1723 = vor.u32 %v1722, %v1718
        %v1724 = vrot.slane %v1723, 4
        %v1726 = vshll.u32 %v1437, 16
        %v1728 = vrot.slane %v1726, 5
        %v1729 = vsel %vm220, %v1724, %v1728
        %v1731 = vshrl.u32 %v1418, 16
        %v1733 = vrot.slane %v1731, 4
        %v1734 = vshll.u32 %v1418, 16
        %v1736 = vrot.slane %v1734, 5
        %v1737 = vor.u32 %v1733, %v1736
        %v1738 = vrot.slane %v1737, 4
        %v1740 = vshll.u32 %v1419, 16
        %v1742 = vrot.slane %v1740, 5
        %v1743 = vsel %vm220, %v1738, %v1742
        %v1744 = vshrl.u32 %v1419, 16
        %v1746 = vrot.slane %v1744, 4
        %v1747 = vor.u32 %v1746, %v1742
        %v1748 = vrot.slane %v1747, 4
        %v1750 = vshll.u32 %v1438, 16
        %v1752 = vrot.slane %v1750, 5
        %v1753 = vsel %vm220, %v1748, %v1752
        %v1755 = vshrl.u32 %v1420, 16
        %v1757 = vrot.slane %v1755, 4
        %v1758 = vshll.u32 %v1420, 16
        %v1760 = vrot.slane %v1758, 5
        %v1761 = vor.u32 %v1757, %v1760
        %v1762 = vrot.slane %v1761, 4
        %v1764 = vshll.u32 %v1421, 16
        %v1766 = vrot.slane %v1764, 5
        %v1767 = vsel %vm220, %v1762, %v1766
        %v1768 = vshrl.u32 %v1421, 16
        %v1770 = vrot.slane %v1768, 4
        %v1771 = vor.u32 %v1770, %v1766
        %v1772 = vrot.slane %v1771, 4
        %v1774 = vshll.u32 %v1439, 16
        %v1776 = vrot.slane %v1774, 5
        %v1777 = vsel %vm220, %v1772, %v1776
        %v1779 = vshrl.u32 %v1422, 16
        %v1781 = vrot.slane %v1779, 4
        %v1782 = vshll.u32 %v1422, 16
        %v1784 = vrot.slane %v1782, 5
        %v1785 = vor.u32 %v1781, %v1784
        %v1786 = vrot.slane %v1785, 4
        %v1788 = vshll.u32 %v1423, 16
        %v1790 = vrot.slane %v1788, 5
        %v1791 = vsel %vm220, %v1786, %v1790
        %v1792 = vshrl.u32 %v1423, 16
        %v1794 = vrot.slane %v1792, 4
        %v1795 = vor.u32 %v1794, %v1790
        %v1796 = vrot.slane %v1795, 4
        %v1798 = vshll.u32 %v1440, 16
        %v1800 = vrot.slane %v1798, 5
        %v1801 = vsel %vm220, %v1796, %v1800
        %v1803 = vshrl.u32 %v1424, 16
        %v1805 = vrot.slane %v1803, 4
        %v1806 = vshll.u32 %v1424, 16
        %v1808 = vrot.slane %v1806, 5
        %v1809 = vor.u32 %v1805, %v1808
        %v1810 = vrot.slane %v1809, 4
        %v1812 = vshll.u32 %v1425, 16
        %v1814 = vrot.slane %v1812, 5
        %v1815 = vsel %vm220, %v1810, %v1814
        %v1816 = vshrl.u32 %v1425, 16
        %v1818 = vrot.slane %v1816, 4
        %v1819 = vor.u32 %v1818, %v1814
        %v1820 = vrot.slane %v1819, 4
        %v1822 = vshll.u32 %v1441, 16
        %v1824 = vrot.slane %v1822, 5
        %v1825 = vsel %vm220, %v1820, %v1824
        %v1826 = vld [vmem:[%s1393] sm:$0xe]
        %v1827 = vld [vmem:[%s1393 + $0xc] sm:$0xe]
        %v1828 = vld [vmem:[%s1393 + $0x18] sm:$0xe]
        %v1829 = vld [vmem:[%s1393 + $0x24] sm:$0xe]
        %v1830 = vld [vmem:[%s1393 + $0x30] sm:$0xe]
        %v1831 = vld [vmem:[%s1393 + $0x3c] sm:$0xe]
        %v1832 = vld [vmem:[%s1393 + $0x48] sm:$0xe]
        %v1833 = vld [vmem:[%s1393 + $0x54] sm:$0xe]
        %v1834 = vld [vmem:[%s1393 + $0x60] sm:$0xe]
        %v1835 = vld [vmem:[%s1393 + $0x6c] sm:$0xe]
        %v1836 = vld [vmem:[%s1393 + $0x78] sm:$0xe]
        %v1837 = vld [vmem:[%s1393 + $0x84] sm:$0xe]
        %v1838 = vld [vmem:[%s1393 + $0x90] sm:$0xe]
        %v1839 = vld [vmem:[%s1393 + $0x9c] sm:$0xe]
        %v1840 = vld [vmem:[%s1393 + $0xa8] sm:$0xe]
        %v1841 = vld [vmem:[%s1393 + $0xb4] sm:$0xe]
        %v1890 = vrot.slane %v1826, 5
        %v1891 = vrot.slane %v1890, 4
        %v1892 = vrot.slane %v1395, 5
        %v1893 = vsel %vm671, %v1891, %v1892
        %v1894 = vrot.slane %v1892, 4
        %v1895 = vrot.slane %v1426, 5
        %v1896 = vsel %vm671, %v1894, %v1895
        %v1897 = vrot.slane %v1827, 5
        %v1898 = vrot.slane %v1897, 4
        %v1899 = vrot.slane %v1397, 5
        %v1900 = vsel %vm671, %v1898, %v1899
        %v1901 = vrot.slane %v1899, 4
        %v1902 = vrot.slane %v1427, 5
        %v1903 = vsel %vm671, %v1901, %v1902
        %v1904 = vrot.slane %v1828, 5
        %v1905 = vrot.slane %v1904, 4
        %v1906 = vrot.slane %v1399, 5
        %v1907 = vsel %vm671, %v1905, %v1906
        %v1908 = vrot.slane %v1906, 4
        %v1909 = vrot.slane %v1428, 5
        %v1910 = vsel %vm671, %v1908, %v1909
        %v1911 = vrot.slane %v1829, 5
        %v1912 = vrot.slane %v1911, 4
        %v1913 = vrot.slane %v1401, 5
        %v1914 = vsel %vm671, %v1912, %v1913
        %v1915 = vrot.slane %v1913, 4
        %v1916 = vrot.slane %v1429, 5
        %v1917 = vsel %vm671, %v1915, %v1916
        %v1918 = vrot.slane %v1830, 5
        %v1919 = vrot.slane %v1918, 4
        %v1920 = vrot.slane %v1403, 5
        %v1921 = vsel %vm671, %v1919, %v1920
        %v1922 = vrot.slane %v1920, 4
        %v1923 = vrot.slane %v1430, 5
        %v1924 = vsel %vm671, %v1922, %v1923
        %v1925 = vrot.slane %v1831, 5
        %v1926 = vrot.slane %v1925, 4
        %v1927 = vrot.slane %v1405, 5
        %v1928 = vsel %vm671, %v1926, %v1927
        %v1929 = vrot.slane %v1927, 4
        %v1930 = vrot.slane %v1431, 5
        %v1931 = vsel %vm671, %v1929, %v1930
        %v1932 = vrot.slane %v1832, 5
        %v1933 = vrot.slane %v1932, 4
        %v1934 = vrot.slane %v1407, 5
        %v1935 = vsel %vm671, %v1933, %v1934
        %v1936 = vrot.slane %v1934, 4
        %v1937 = vrot.slane %v1432, 5
        %v1938 = vsel %vm671, %v1936, %v1937
        %v1939 = vrot.slane %v1833, 5
        %v1940 = vrot.slane %v1939, 4
        %v1941 = vrot.slane %v1409, 5
        %v1942 = vsel %vm671, %v1940, %v1941
        %v1943 = vrot.slane %v1941, 4
        %v1944 = vrot.slane %v1433, 5
        %v1945 = vsel %vm671, %v1943, %v1944
        %v1946 = vrot.slane %v1834, 5
        %v1947 = vrot.slane %v1946, 4
        %v1948 = vrot.slane %v1411, 5
        %v1949 = vsel %vm671, %v1947, %v1948
        %v1950 = vrot.slane %v1948, 4
        %v1951 = vrot.slane %v1434, 5
        %v1952 = vsel %vm671, %v1950, %v1951
        %v1953 = vrot.slane %v1835, 5
        %v1954 = vrot.slane %v1953, 4
        %v1955 = vrot.slane %v1413, 5
        %v1956 = vsel %vm671, %v1954, %v1955
        %v1957 = vrot.slane %v1955, 4
        %v1958 = vrot.slane %v1435, 5
        %v1959 = vsel %vm671, %v1957, %v1958
        %v1960 = vrot.slane %v1836, 5
        %v1961 = vrot.slane %v1960, 4
        %v1962 = vrot.slane %v1415, 5
        %v1963 = vsel %vm671, %v1961, %v1962
        %v1964 = vrot.slane %v1962, 4
        %v1965 = vrot.slane %v1436, 5
        %v1966 = vsel %vm671, %v1964, %v1965
        %v1967 = vrot.slane %v1837, 5
        %v1968 = vrot.slane %v1967, 4
        %v1969 = vrot.slane %v1417, 5
        %v1970 = vsel %vm671, %v1968, %v1969
        %v1971 = vrot.slane %v1969, 4
        %v1972 = vrot.slane %v1437, 5
        %v1973 = vsel %vm671, %v1971, %v1972
        %v1974 = vrot.slane %v1838, 5
        %v1975 = vrot.slane %v1974, 4
        %v1976 = vrot.slane %v1419, 5
        %v1977 = vsel %vm671, %v1975, %v1976
        %v1978 = vrot.slane %v1976, 4
        %v1979 = vrot.slane %v1438, 5
        %v1980 = vsel %vm671, %v1978, %v1979
        %v1981 = vrot.slane %v1839, 5
        %v1982 = vrot.slane %v1981, 4
        %v1983 = vrot.slane %v1421, 5
        %v1984 = vsel %vm671, %v1982, %v1983
        %v1985 = vrot.slane %v1983, 4
        %v1986 = vrot.slane %v1439, 5
        %v1987 = vsel %vm671, %v1985, %v1986
        %v1988 = vrot.slane %v1840, 5
        %v1989 = vrot.slane %v1988, 4
        %v1990 = vrot.slane %v1423, 5
        %v1991 = vsel %vm671, %v1989, %v1990
        %v1992 = vrot.slane %v1990, 4
        %v1993 = vrot.slane %v1440, 5
        %v1994 = vsel %vm671, %v1992, %v1993
        %v1995 = vrot.slane %v1841, 5
        %v1996 = vrot.slane %v1995, 4
        %v1997 = vrot.slane %v1425, 5
        %v1998 = vsel %vm671, %v1996, %v1997
        %v1999 = vrot.slane %v1997, 4
        %v2000 = vrot.slane %v1441, 5
        %v2001 = vsel %vm671, %v1999, %v2000
        %v2018 = vunpack.c.l.b16 %v170
        %v2019 = vunpack.c.l.b16 %v171
        %v2020 = vunpack.c.l.b16 %v172
        %v2021 = vunpack.c.l.b16 %v173
        %v2022 = vunpack.c.l.b16 %v174
        %v2023 = vunpack.c.l.b16 %v175
        %v2024 = vunpack.c.l.b16 %v176
        %v2025 = vunpack.c.l.b16 %v177
        %v2026 = vunpack.c.l.b16 %v178
        %v2027 = vunpack.c.l.b16 %v179
        %v2028 = vunpack.c.l.b16 %v180
        %v2029 = vunpack.c.l.b16 %v181
        %v2030 = vunpack.c.l.b16 %v182
        %v2031 = vunpack.c.l.b16 %v183
        %v2032 = vunpack.c.l.b16 %v184
        %v2033 = vunpack.c.l.b16 %v185
        %v2034 = vunpack.c.l.b16 %v186
        %v2035 = vunpack.c.l.b16 %v187
        %v2036 = vunpack.c.l.b16 %v188
        %v2037 = vunpack.c.l.b16 %v189
        %v2038 = vunpack.c.l.b16 %v190
        %v2039 = vunpack.c.l.b16 %v191
        %v2040 = vunpack.c.l.b16 %v192
        %v2041 = vunpack.c.l.b16 %v193
        %v2042 = vunpack.c.l.b16 %v194
        %v2043 = vunpack.c.l.b16 %v195
        %v2044 = vunpack.c.l.b16 %v196
        %v2045 = vunpack.c.l.b16 %v197
        %v2046 = vunpack.c.l.b16 %v198
        %v2047 = vunpack.c.l.b16 %v199
        %v2048 = vunpack.c.l.b16 %v200
        %v2049 = vunpack.c.l.b16 %v201
        %v2050 = vpack.c.b16 %v2019, %v2018
        %v2051 = vpack.c.b16 %v2021, %v2020
        %v2052 = vpack.c.b16 %v2023, %v2022
        %v2053 = vpack.c.b16 %v2025, %v2024
        %v2054 = vpack.c.b16 %v2027, %v2026
        %v2055 = vpack.c.b16 %v2029, %v2028
        %v2056 = vpack.c.b16 %v2031, %v2030
        %v2057 = vpack.c.b16 %v2033, %v2032
        %v2058 = vpack.c.b16 %v2035, %v2034
        %v2059 = vpack.c.b16 %v2037, %v2036
        %v2060 = vpack.c.b16 %v2039, %v2038
        %v2061 = vpack.c.b16 %v2041, %v2040
        %v2062 = vpack.c.b16 %v2043, %v2042
        %v2063 = vpack.c.b16 %v2045, %v2044
        %v2064 = vpack.c.b16 %v2047, %v2046
        %v2065 = vpack.c.b16 %v2049, %v2048
        %v2066 = vunpack.c.l.b16 %v234
        %v2067 = vunpack.c.l.b16 %v244
        %v2068 = vunpack.c.l.b16 %v258
        %v2069 = vunpack.c.l.b16 %v268
        %v2070 = vunpack.c.l.b16 %v282
        %v2071 = vunpack.c.l.b16 %v292
        %v2072 = vunpack.c.l.b16 %v306
        %v2073 = vunpack.c.l.b16 %v316
        %v2074 = vunpack.c.l.b16 %v330
        %v2075 = vunpack.c.l.b16 %v340
        %v2076 = vunpack.c.l.b16 %v354
        %v2077 = vunpack.c.l.b16 %v364
        %v2078 = vunpack.c.l.b16 %v378
        %v2079 = vunpack.c.l.b16 %v388
        %v2080 = vunpack.c.l.b16 %v402
        %v2081 = vunpack.c.l.b16 %v412
        %v2082 = vunpack.c.l.b16 %v426
        %v2083 = vunpack.c.l.b16 %v436
        %v2084 = vunpack.c.l.b16 %v450
        %v2085 = vunpack.c.l.b16 %v460
        %v2086 = vunpack.c.l.b16 %v474
        %v2087 = vunpack.c.l.b16 %v484
        %v2088 = vunpack.c.l.b16 %v498
        %v2089 = vunpack.c.l.b16 %v508
        %v2090 = vunpack.c.l.b16 %v522
        %v2091 = vunpack.c.l.b16 %v532
        %v2092 = vunpack.c.l.b16 %v546
        %v2093 = vunpack.c.l.b16 %v556
        %v2094 = vunpack.c.l.b16 %v570
        %v2095 = vunpack.c.l.b16 %v580
        %v2096 = vunpack.c.l.b16 %v594
        %v2097 = vunpack.c.l.b16 %v604
        %v2098 = vpack.c.b16 %v2067, %v2066
        %v2099 = vpack.c.b16 %v2069, %v2068
        %v2100 = vpack.c.b16 %v2071, %v2070
        %v2101 = vpack.c.b16 %v2073, %v2072
        %v2102 = vpack.c.b16 %v2075, %v2074
        %v2103 = vpack.c.b16 %v2077, %v2076
        %v2104 = vpack.c.b16 %v2079, %v2078
        %v2105 = vpack.c.b16 %v2081, %v2080
        %v2106 = vpack.c.b16 %v2083, %v2082
        %v2107 = vpack.c.b16 %v2085, %v2084
        %v2108 = vpack.c.b16 %v2087, %v2086
        %v2109 = vpack.c.b16 %v2089, %v2088
        %v2110 = vpack.c.b16 %v2091, %v2090
        %v2111 = vpack.c.b16 %v2093, %v2092
        %v2112 = vpack.c.b16 %v2095, %v2094
        %v2113 = vpack.c.b16 %v2097, %v2096
        %2114 = vrot.lane.b32.xlu0 %v2098, 4
        %v2115 = vpop.permute.xlu0 %2114
        %2116 = vrot.lane.b32.xlu0 %v2099, 4
        %v2117 = vpop.permute.xlu0 %2116
        %2118 = vrot.lane.b32.xlu0 %v2100, 4
        %v2119 = vpop.permute.xlu0 %2118
        %2120 = vrot.lane.b32.xlu0 %v2101, 4
        %v2121 = vpop.permute.xlu0 %2120
        %2122 = vrot.lane.b32.xlu0 %v2102, 4
        %v2123 = vpop.permute.xlu0 %2122
        %2124 = vrot.lane.b32.xlu0 %v2103, 4
        %v2125 = vpop.permute.xlu0 %2124
        %2126 = vrot.lane.b32.xlu0 %v2104, 4
        %v2127 = vpop.permute.xlu0 %2126
        %2128 = vrot.lane.b32.xlu0 %v2105, 4
        %v2129 = vpop.permute.xlu0 %2128
        %2130 = vrot.lane.b32.xlu0 %v2106, 4
        %v2131 = vpop.permute.xlu0 %2130
        %2132 = vrot.lane.b32.xlu0 %v2107, 4
        %v2133 = vpop.permute.xlu0 %2132
        %2134 = vrot.lane.b32.xlu0 %v2108, 4
        %v2135 = vpop.permute.xlu0 %2134
        %2136 = vrot.lane.b32.xlu0 %v2109, 4
        %v2137 = vpop.permute.xlu0 %2136
        %2138 = vrot.lane.b32.xlu0 %v2110, 4
        %v2139 = vpop.permute.xlu0 %2138
        %2140 = vrot.lane.b32.xlu0 %v2111, 4
        %v2141 = vpop.permute.xlu0 %2140
        %2142 = vrot.lane.b32.xlu0 %v2112, 4
        %v2143 = vpop.permute.xlu0 %2142
        %2144 = vrot.lane.b32.xlu0 %v2113, 4
        %v2145 = vpop.permute.xlu0 %2144
        %v2146 = vunpack.c.l.b16 %v675
        %v2147 = vunpack.c.l.b16 %v678
        %v2148 = vunpack.c.l.b16 %v682
        %v2149 = vunpack.c.l.b16 %v685
        %v2150 = vunpack.c.l.b16 %v689
        %v2151 = vunpack.c.l.b16 %v692
        %v2152 = vunpack.c.l.b16 %v696
        %v2153 = vunpack.c.l.b16 %v699
        %v2154 = vunpack.c.l.b16 %v703
        %v2155 = vunpack.c.l.b16 %v706
        %v2156 = vunpack.c.l.b16 %v710
        %v2157 = vunpack.c.l.b16 %v713
        %v2158 = vunpack.c.l.b16 %v717
        %v2159 = vunpack.c.l.b16 %v720
        %v2160 = vunpack.c.l.b16 %v724
        %v2161 = vunpack.c.l.b16 %v727
        %v2162 = vunpack.c.l.b16 %v731
        %v2163 = vunpack.c.l.b16 %v734
        %v2164 = vunpack.c.l.b16 %v738
        %v2165 = vunpack.c.l.b16 %v741
        %v2166 = vunpack.c.l.b16 %v745
        %v2167 = vunpack.c.l.b16 %v748
        %v2168 = vunpack.c.l.b16 %v752
        %v2169 = vunpack.c.l.b16 %v755
        %v2170 = vunpack.c.l.b16 %v759
        %v2171 = vunpack.c.l.b16 %v762
        %v2172 = vunpack.c.l.b16 %v766
        %v2173 = vunpack.c.l.b16 %v769
        %v2174 = vunpack.c.l.b16 %v773
        %v2175 = vunpack.c.l.b16 %v776
        %v2176 = vunpack.c.l.b16 %v780
        %v2177 = vunpack.c.l.b16 %v783
        %v2178 = vpack.c.b16 %v2147, %v2146
        %v2179 = vpack.c.b16 %v2149, %v2148
        %v2180 = vpack.c.b16 %v2151, %v2150
        %v2181 = vpack.c.b16 %v2153, %v2152
        %v2182 = vpack.c.b16 %v2155, %v2154
        %v2183 = vpack.c.b16 %v2157, %v2156
        %v2184 = vpack.c.b16 %v2159, %v2158
        %v2185 = vpack.c.b16 %v2161, %v2160
        %v2186 = vpack.c.b16 %v2163, %v2162
        %v2187 = vpack.c.b16 %v2165, %v2164
        %v2188 = vpack.c.b16 %v2167, %v2166
        %v2189 = vpack.c.b16 %v2169, %v2168
        %v2190 = vpack.c.b16 %v2171, %v2170
        %v2191 = vpack.c.b16 %v2173, %v2172
        %v2192 = vpack.c.b16 %v2175, %v2174
        %v2193 = vpack.c.b16 %v2177, %v2176
        %2194 = vrot.lane.b32.xlu0 %v2178, 8
        %v2195 = vpop.permute.xlu0 %2194
        %2196 = vrot.lane.b32.xlu0 %v2179, 8
        %v2197 = vpop.permute.xlu0 %2196
        %2198 = vrot.lane.b32.xlu0 %v2180, 8
        %v2199 = vpop.permute.xlu0 %2198
        %2200 = vrot.lane.b32.xlu0 %v2181, 8
        %v2201 = vpop.permute.xlu0 %2200
        %2202 = vrot.lane.b32.xlu0 %v2182, 8
        %v2203 = vpop.permute.xlu0 %2202
        %2204 = vrot.lane.b32.xlu0 %v2183, 8
        %v2205 = vpop.permute.xlu0 %2204
        %2206 = vrot.lane.b32.xlu0 %v2184, 8
        %v2207 = vpop.permute.xlu0 %2206
        %2208 = vrot.lane.b32.xlu0 %v2185, 8
        %v2209 = vpop.permute.xlu0 %2208
        %2210 = vrot.lane.b32.xlu0 %v2186, 8
        %v2211 = vpop.permute.xlu0 %2210
        %2212 = vrot.lane.b32.xlu0 %v2187, 8
        %v2213 = vpop.permute.xlu0 %2212
        %2214 = vrot.lane.b32.xlu0 %v2188, 8
        %v2215 = vpop.permute.xlu0 %2214
        %2216 = vrot.lane.b32.xlu0 %v2189, 8
        %v2217 = vpop.permute.xlu0 %2216
        %2218 = vrot.lane.b32.xlu0 %v2190, 8
        %v2219 = vpop.permute.xlu0 %2218
        %2220 = vrot.lane.b32.xlu0 %v2191, 8
        %v2221 = vpop.permute.xlu0 %2220
        %2222 = vrot.lane.b32.xlu0 %v2192, 8
        %v2223 = vpop.permute.xlu0 %2222
        %2224 = vrot.lane.b32.xlu0 %v2193, 8
        %v2225 = vpop.permute.xlu0 %2224
        %v2242 = vunpack.c.l.b16 %v785
        %v2243 = vunpack.c.l.b16 %v786
        %v2244 = vunpack.c.l.b16 %v787
        %v2245 = vunpack.c.l.b16 %v788
        %v2246 = vunpack.c.l.b16 %v789
        %v2247 = vunpack.c.l.b16 %v790
        %v2248 = vunpack.c.l.b16 %v791
        %v2249 = vunpack.c.l.b16 %v792
        %v2250 = vunpack.c.l.b16 %v793
        %v2251 = vunpack.c.l.b16 %v794
        %v2252 = vunpack.c.l.b16 %v795
        %v2253 = vunpack.c.l.b16 %v796
        %v2254 = vunpack.c.l.b16 %v797
        %v2255 = vunpack.c.l.b16 %v798
        %v2256 = vunpack.c.l.b16 %v799
        %v2257 = vunpack.c.l.b16 %v800
        %v2258 = vunpack.c.l.b16 %v801
        %v2259 = vunpack.c.l.b16 %v802
        %v2260 = vunpack.c.l.b16 %v803
        %v2261 = vunpack.c.l.b16 %v804
        %v2262 = vunpack.c.l.b16 %v805
        %v2263 = vunpack.c.l.b16 %v806
        %v2264 = vunpack.c.l.b16 %v807
        %v2265 = vunpack.c.l.b16 %v808
        %v2266 = vunpack.c.l.b16 %v809
        %v2267 = vunpack.c.l.b16 %v810
        %v2268 = vunpack.c.l.b16 %v811
        %v2269 = vunpack.c.l.b16 %v812
        %v2270 = vunpack.c.l.b16 %v813
        %v2271 = vunpack.c.l.b16 %v814
        %v2272 = vunpack.c.l.b16 %v815
        %v2273 = vunpack.c.l.b16 %v816
        %v2274 = vpack.c.b16 %v2243, %v2242
        %v2275 = vpack.c.b16 %v2245, %v2244
        %v2276 = vpack.c.b16 %v2247, %v2246
        %v2277 = vpack.c.b16 %v2249, %v2248
        %v2278 = vpack.c.b16 %v2251, %v2250
        %v2279 = vpack.c.b16 %v2253, %v2252
        %v2280 = vpack.c.b16 %v2255, %v2254
        %v2281 = vpack.c.b16 %v2257, %v2256
        %v2282 = vpack.c.b16 %v2259, %v2258
        %v2283 = vpack.c.b16 %v2261, %v2260
        %v2284 = vpack.c.b16 %v2263, %v2262
        %v2285 = vpack.c.b16 %v2265, %v2264
        %v2286 = vpack.c.b16 %v2267, %v2266
        %v2287 = vpack.c.b16 %v2269, %v2268
        %v2288 = vpack.c.b16 %v2271, %v2270
        %v2289 = vpack.c.b16 %v2273, %v2272
        %2290 = vrot.lane.b32.xlu0 %v2274, 12
        %v2291 = vpop.permute.xlu0 %2290
        %2292 = vrot.lane.b32.xlu0 %v2275, 12
        %v2293 = vpop.permute.xlu0 %2292
        %2294 = vrot.lane.b32.xlu0 %v2276, 12
        %v2295 = vpop.permute.xlu0 %2294
        %2296 = vrot.lane.b32.xlu0 %v2277, 12
        %v2297 = vpop.permute.xlu0 %2296
        %2298 = vrot.lane.b32.xlu0 %v2278, 12
        %v2299 = vpop.permute.xlu0 %2298
        %2300 = vrot.lane.b32.xlu0 %v2279, 12
        %v2301 = vpop.permute.xlu0 %2300
        %2302 = vrot.lane.b32.xlu0 %v2280, 12
        %v2303 = vpop.permute.xlu0 %2302
        %2304 = vrot.lane.b32.xlu0 %v2281, 12
        %v2305 = vpop.permute.xlu0 %2304
        %2306 = vrot.lane.b32.xlu0 %v2282, 12
        %v2307 = vpop.permute.xlu0 %2306
        %2308 = vrot.lane.b32.xlu0 %v2283, 12
        %v2309 = vpop.permute.xlu0 %2308
        %2310 = vrot.lane.b32.xlu0 %v2284, 12
        %v2311 = vpop.permute.xlu0 %2310
        %2312 = vrot.lane.b32.xlu0 %v2285, 12
        %v2313 = vpop.permute.xlu0 %2312
        %2314 = vrot.lane.b32.xlu0 %v2286, 12
        %v2315 = vpop.permute.xlu0 %2314
        %2316 = vrot.lane.b32.xlu0 %v2287, 12
        %v2317 = vpop.permute.xlu0 %2316
        %2318 = vrot.lane.b32.xlu0 %v2288, 12
        %v2319 = vpop.permute.xlu0 %2318
        %2320 = vrot.lane.b32.xlu0 %v2289, 12
        %v2321 = vpop.permute.xlu0 %2320
        %v2322 = vunpack.c.l.b16 %v846
        %v2323 = vunpack.c.l.b16 %v856
        %v2324 = vunpack.c.l.b16 %v870
        %v2325 = vunpack.c.l.b16 %v880
        %v2326 = vunpack.c.l.b16 %v894
        %v2327 = vunpack.c.l.b16 %v904
        %v2328 = vunpack.c.l.b16 %v918
        %v2329 = vunpack.c.l.b16 %v928
        %v2330 = vunpack.c.l.b16 %v942
        %v2331 = vunpack.c.l.b16 %v952
        %v2332 = vunpack.c.l.b16 %v966
        %v2333 = vunpack.c.l.b16 %v976
        %v2334 = vunpack.c.l.b16 %v990
        %v2335 = vunpack.c.l.b16 %v1000
        %v2336 = vunpack.c.l.b16 %v1014
        %v2337 = vunpack.c.l.b16 %v1024
        %v2338 = vunpack.c.l.b16 %v1038
        %v2339 = vunpack.c.l.b16 %v1048
        %v2340 = vunpack.c.l.b16 %v1062
        %v2341 = vunpack.c.l.b16 %v1072
        %v2342 = vunpack.c.l.b16 %v1086
        %v2343 = vunpack.c.l.b16 %v1096
        %v2344 = vunpack.c.l.b16 %v1110
        %v2345 = vunpack.c.l.b16 %v1120
        %v2346 = vunpack.c.l.b16 %v1134
        %v2347 = vunpack.c.l.b16 %v1144
        %v2348 = vunpack.c.l.b16 %v1158
        %v2349 = vunpack.c.l.b16 %v1168
        %v2350 = vunpack.c.l.b16 %v1182
        %v2351 = vunpack.c.l.b16 %v1192
        %v2352 = vunpack.c.l.b16 %v1206
        %v2353 = vunpack.c.l.b16 %v1216
        %v2354 = vpack.c.b16 %v2323, %v2322
        %v2355 = vpack.c.b16 %v2325, %v2324
        %v2356 = vpack.c.b16 %v2327, %v2326
        %v2357 = vpack.c.b16 %v2329, %v2328
        %v2358 = vpack.c.b16 %v2331, %v2330
        %v2359 = vpack.c.b16 %v2333, %v2332
        %v2360 = vpack.c.b16 %v2335, %v2334
        %v2361 = vpack.c.b16 %v2337, %v2336
        %v2362 = vpack.c.b16 %v2339, %v2338
        %v2363 = vpack.c.b16 %v2341, %v2340
        %v2364 = vpack.c.b16 %v2343, %v2342
        %v2365 = vpack.c.b16 %v2345, %v2344
        %v2366 = vpack.c.b16 %v2347, %v2346
        %v2367 = vpack.c.b16 %v2349, %v2348
        %v2368 = vpack.c.b16 %v2351, %v2350
        %v2369 = vpack.c.b16 %v2353, %v2352
        %2370 = vrot.lane.b32.xlu0 %v2354, 16
        %v2371 = vpop.permute.xlu0 %2370
        %2372 = vrot.lane.b32.xlu0 %v2355, 16
        %v2373 = vpop.permute.xlu0 %2372
        %2374 = vrot.lane.b32.xlu0 %v2356, 16
        %v2375 = vpop.permute.xlu0 %2374
        %2376 = vrot.lane.b32.xlu0 %v2357, 16
        %v2377 = vpop.permute.xlu0 %2376
        %2378 = vrot.lane.b32.xlu0 %v2358, 16
        %v2379 = vpop.permute.xlu0 %2378
        %2380 = vrot.lane.b32.xlu0 %v2359, 16
        %v2381 = vpop.permute.xlu0 %2380
        %2382 = vrot.lane.b32.xlu0 %v2360, 16
        %v2383 = vpop.permute.xlu0 %2382
        %2384 = vrot.lane.b32.xlu0 %v2361, 16
        %v2385 = vpop.permute.xlu0 %2384
        %2386 = vrot.lane.b32.xlu0 %v2362, 16
        %v2387 = vpop.permute.xlu0 %2386
        %2388 = vrot.lane.b32.xlu0 %v2363, 16
        %v2389 = vpop.permute.xlu0 %2388
        %2390 = vrot.lane.b32.xlu0 %v2364, 16
        %v2391 = vpop.permute.xlu0 %2390
        %2392 = vrot.lane.b32.xlu0 %v2365, 16
        %v2393 = vpop.permute.xlu0 %2392
        %2394 = vrot.lane.b32.xlu0 %v2366, 16
        %v2395 = vpop.permute.xlu0 %2394
        %2396 = vrot.lane.b32.xlu0 %v2367, 16
        %v2397 = vpop.permute.xlu0 %2396
        %2398 = vrot.lane.b32.xlu0 %v2368, 16
        %v2399 = vpop.permute.xlu0 %2398
        %2400 = vrot.lane.b32.xlu0 %v2369, 16
        %v2401 = vpop.permute.xlu0 %2400
        %v2402 = vunpack.c.l.b16 %v1284
        %v2403 = vunpack.c.l.b16 %v1287
        %v2404 = vunpack.c.l.b16 %v1291
        %v2405 = vunpack.c.l.b16 %v1294
        %v2406 = vunpack.c.l.b16 %v1298
        %v2407 = vunpack.c.l.b16 %v1301
        %v2408 = vunpack.c.l.b16 %v1305
        %v2409 = vunpack.c.l.b16 %v1308
        %v2410 = vunpack.c.l.b16 %v1312
        %v2411 = vunpack.c.l.b16 %v1315
        %v2412 = vunpack.c.l.b16 %v1319
        %v2413 = vunpack.c.l.b16 %v1322
        %v2414 = vunpack.c.l.b16 %v1326
        %v2415 = vunpack.c.l.b16 %v1329
        %v2416 = vunpack.c.l.b16 %v1333
        %v2417 = vunpack.c.l.b16 %v1336
        %v2418 = vunpack.c.l.b16 %v1340
        %v2419 = vunpack.c.l.b16 %v1343
        %v2420 = vunpack.c.l.b16 %v1347
        %v2421 = vunpack.c.l.b16 %v1350
        %v2422 = vunpack.c.l.b16 %v1354
        %v2423 = vunpack.c.l.b16 %v1357
        %v2424 = vunpack.c.l.b16 %v1361
        %v2425 = vunpack.c.l.b16 %v1364
        %v2426 = vunpack.c.l.b16 %v1368
        %v2427 = vunpack.c.l.b16 %v1371
        %v2428 = vunpack.c.l.b16 %v1375
        %v2429 = vunpack.c.l.b16 %v1378
        %v2430 = vunpack.c.l.b16 %v1382
        %v2431 = vunpack.c.l.b16 %v1385
        %v2432 = vunpack.c.l.b16 %v1389
        %v2433 = vunpack.c.l.b16 %v1392
        %v2434 = vpack.c.b16 %v2403, %v2402
        %v2435 = vpack.c.b16 %v2405, %v2404
        %v2436 = vpack.c.b16 %v2407, %v2406
        %v2437 = vpack.c.b16 %v2409, %v2408
        %v2438 = vpack.c.b16 %v2411, %v2410
        %v2439 = vpack.c.b16 %v2413, %v2412
        %v2440 = vpack.c.b16 %v2415, %v2414
        %v2441 = vpack.c.b16 %v2417, %v2416
        %v2442 = vpack.c.b16 %v2419, %v2418
        %v2443 = vpack.c.b16 %v2421, %v2420
        %v2444 = vpack.c.b16 %v2423, %v2422
        %v2445 = vpack.c.b16 %v2425, %v2424
        %v2446 = vpack.c.b16 %v2427, %v2426
        %v2447 = vpack.c.b16 %v2429, %v2428
        %v2448 = vpack.c.b16 %v2431, %v2430
        %v2449 = vpack.c.b16 %v2433, %v2432
        %2450 = vrot.lane.b32.xlu0 %v2434, 20
        %v2451 = vpop.permute.xlu0 %2450
        %2452 = vrot.lane.b32.xlu0 %v2435, 20
        %v2453 = vpop.permute.xlu0 %2452
        %2454 = vrot.lane.b32.xlu0 %v2436, 20
        %v2455 = vpop.permute.xlu0 %2454
        %2456 = vrot.lane.b32.xlu0 %v2437, 20
        %v2457 = vpop.permute.xlu0 %2456
        %2458 = vrot.lane.b32.xlu0 %v2438, 20
        %v2459 = vpop.permute.xlu0 %2458
        %2460 = vrot.lane.b32.xlu0 %v2439, 20
        %v2461 = vpop.permute.xlu0 %2460
        %2462 = vrot.lane.b32.xlu0 %v2440, 20
        %v2463 = vpop.permute.xlu0 %2462
        %2464 = vrot.lane.b32.xlu0 %v2441, 20
        %v2465 = vpop.permute.xlu0 %2464
        %2466 = vrot.lane.b32.xlu0 %v2442, 20
        %v2467 = vpop.permute.xlu0 %2466
        %2468 = vrot.lane.b32.xlu0 %v2443, 20
        %v2469 = vpop.permute.xlu0 %2468
        %2470 = vrot.lane.b32.xlu0 %v2444, 20
        %v2471 = vpop.permute.xlu0 %2470
        %2472 = vrot.lane.b32.xlu0 %v2445, 20
        %v2473 = vpop.permute.xlu0 %2472
        %2474 = vrot.lane.b32.xlu0 %v2446, 20
        %v2475 = vpop.permute.xlu0 %2474
        %2476 = vrot.lane.b32.xlu0 %v2447, 20
        %v2477 = vpop.permute.xlu0 %2476
        %2478 = vrot.lane.b32.xlu0 %v2448, 20
        %v2479 = vpop.permute.xlu0 %2478
        %2480 = vrot.lane.b32.xlu0 %v2449, 20
        %v2481 = vpop.permute.xlu0 %2480
        %v2498 = vunpack.c.l.b16 %v1394
        %v2499 = vunpack.c.l.b16 %v1395
        %v2500 = vunpack.c.l.b16 %v1396
        %v2501 = vunpack.c.l.b16 %v1397
        %v2502 = vunpack.c.l.b16 %v1398
        %v2503 = vunpack.c.l.b16 %v1399
        %v2504 = vunpack.c.l.b16 %v1400
        %v2505 = vunpack.c.l.b16 %v1401
        %v2506 = vunpack.c.l.b16 %v1402
        %v2507 = vunpack.c.l.b16 %v1403
        %v2508 = vunpack.c.l.b16 %v1404
        %v2509 = vunpack.c.l.b16 %v1405
        %v2510 = vunpack.c.l.b16 %v1406
        %v2511 = vunpack.c.l.b16 %v1407
        %v2512 = vunpack.c.l.b16 %v1408
        %v2513 = vunpack.c.l.b16 %v1409
        %v2514 = vunpack.c.l.b16 %v1410
        %v2515 = vunpack.c.l.b16 %v1411
        %v2516 = vunpack.c.l.b16 %v1412
        %v2517 = vunpack.c.l.b16 %v1413
        %v2518 = vunpack.c.l.b16 %v1414
        %v2519 = vunpack.c.l.b16 %v1415
        %v2520 = vunpack.c.l.b16 %v1416
        %v2521 = vunpack.c.l.b16 %v1417
        %v2522 = vunpack.c.l.b16 %v1418
        %v2523 = vunpack.c.l.b16 %v1419
        %v2524 = vunpack.c.l.b16 %v1420
        %v2525 = vunpack.c.l.b16 %v1421
        %v2526 = vunpack.c.l.b16 %v1422
        %v2527 = vunpack.c.l.b16 %v1423
        %v2528 = vunpack.c.l.b16 %v1424
        %v2529 = vunpack.c.l.b16 %v1425
        %v2530 = vpack.c.b16 %v2499, %v2498
        %v2531 = vpack.c.b16 %v2501, %v2500
        %v2532 = vpack.c.b16 %v2503, %v2502
        %v2533 = vpack.c.b16 %v2505, %v2504
        %v2534 = vpack.c.b16 %v2507, %v2506
        %v2535 = vpack.c.b16 %v2509, %v2508
        %v2536 = vpack.c.b16 %v2511, %v2510
        %v2537 = vpack.c.b16 %v2513, %v2512
        %v2538 = vpack.c.b16 %v2515, %v2514
        %v2539 = vpack.c.b16 %v2517, %v2516
        %v2540 = vpack.c.b16 %v2519, %v2518
        %v2541 = vpack.c.b16 %v2521, %v2520
        %v2542 = vpack.c.b16 %v2523, %v2522
        %v2543 = vpack.c.b16 %v2525, %v2524
        %v2544 = vpack.c.b16 %v2527, %v2526
        %v2545 = vpack.c.b16 %v2529, %v2528
        %2546 = vrot.lane.b32.xlu0 %v2530, 24
        %v2547 = vpop.permute.xlu0 %2546
        %2548 = vrot.lane.b32.xlu0 %v2531, 24
        %v2549 = vpop.permute.xlu0 %2548
        %2550 = vrot.lane.b32.xlu0 %v2532, 24
        %v2551 = vpop.permute.xlu0 %2550
        %2552 = vrot.lane.b32.xlu0 %v2533, 24
        %v2553 = vpop.permute.xlu0 %2552
        %2554 = vrot.lane.b32.xlu0 %v2534, 24
        %v2555 = vpop.permute.xlu0 %2554
        %2556 = vrot.lane.b32.xlu0 %v2535, 24
        %v2557 = vpop.permute.xlu0 %2556
        %2558 = vrot.lane.b32.xlu0 %v2536, 24
        %v2559 = vpop.permute.xlu0 %2558
        %2560 = vrot.lane.b32.xlu0 %v2537, 24
        %v2561 = vpop.permute.xlu0 %2560
        %2562 = vrot.lane.b32.xlu0 %v2538, 24
        %v2563 = vpop.permute.xlu0 %2562
        %2564 = vrot.lane.b32.xlu0 %v2539, 24
        %v2565 = vpop.permute.xlu0 %2564
        %2566 = vrot.lane.b32.xlu0 %v2540, 24
        %v2567 = vpop.permute.xlu0 %2566
        %2568 = vrot.lane.b32.xlu0 %v2541, 24
        %v2569 = vpop.permute.xlu0 %2568
        %2570 = vrot.lane.b32.xlu0 %v2542, 24
        %v2571 = vpop.permute.xlu0 %2570
        %2572 = vrot.lane.b32.xlu0 %v2543, 24
        %v2573 = vpop.permute.xlu0 %2572
        %2574 = vrot.lane.b32.xlu0 %v2544, 24
        %v2575 = vpop.permute.xlu0 %2574
        %2576 = vrot.lane.b32.xlu0 %v2545, 24
        %v2577 = vpop.permute.xlu0 %2576
        %v2578 = vunpack.c.l.b16 %v1455
        %v2579 = vunpack.c.l.b16 %v1465
        %v2580 = vunpack.c.l.b16 %v1479
        %v2581 = vunpack.c.l.b16 %v1489
        %v2582 = vunpack.c.l.b16 %v1503
        %v2583 = vunpack.c.l.b16 %v1513
        %v2584 = vunpack.c.l.b16 %v1527
        %v2585 = vunpack.c.l.b16 %v1537
        %v2586 = vunpack.c.l.b16 %v1551
        %v2587 = vunpack.c.l.b16 %v1561
        %v2588 = vunpack.c.l.b16 %v1575
        %v2589 = vunpack.c.l.b16 %v1585
        %v2590 = vunpack.c.l.b16 %v1599
        %v2591 = vunpack.c.l.b16 %v1609
        %v2592 = vunpack.c.l.b16 %v1623
        %v2593 = vunpack.c.l.b16 %v1633
        %v2594 = vunpack.c.l.b16 %v1647
        %v2595 = vunpack.c.l.b16 %v1657
        %v2596 = vunpack.c.l.b16 %v1671
        %v2597 = vunpack.c.l.b16 %v1681
        %v2598 = vunpack.c.l.b16 %v1695
        %v2599 = vunpack.c.l.b16 %v1705
        %v2600 = vunpack.c.l.b16 %v1719
        %v2601 = vunpack.c.l.b16 %v1729
        %v2602 = vunpack.c.l.b16 %v1743
        %v2603 = vunpack.c.l.b16 %v1753
        %v2604 = vunpack.c.l.b16 %v1767
        %v2605 = vunpack.c.l.b16 %v1777
        %v2606 = vunpack.c.l.b16 %v1791
        %v2607 = vunpack.c.l.b16 %v1801
        %v2608 = vunpack.c.l.b16 %v1815
        %v2609 = vunpack.c.l.b16 %v1825
        %v2610 = vpack.c.b16 %v2579, %v2578
        %v2611 = vpack.c.b16 %v2581, %v2580
        %v2612 = vpack.c.b16 %v2583, %v2582
        %v2613 = vpack.c.b16 %v2585, %v2584
        %v2614 = vpack.c.b16 %v2587, %v2586
        %v2615 = vpack.c.b16 %v2589, %v2588
        %v2616 = vpack.c.b16 %v2591, %v2590
        %v2617 = vpack.c.b16 %v2593, %v2592
        %v2618 = vpack.c.b16 %v2595, %v2594
        %v2619 = vpack.c.b16 %v2597, %v2596
        %v2620 = vpack.c.b16 %v2599, %v2598
        %v2621 = vpack.c.b16 %v2601, %v2600
        %v2622 = vpack.c.b16 %v2603, %v2602
        %v2623 = vpack.c.b16 %v2605, %v2604
        %v2624 = vpack.c.b16 %v2607, %v2606
        %v2625 = vpack.c.b16 %v2609, %v2608
        %2626 = vrot.lane.b32.xlu0 %v2610, 28
        %v2627 = vpop.permute.xlu0 %2626
        %2628 = vrot.lane.b32.xlu0 %v2611, 28
        %v2629 = vpop.permute.xlu0 %2628
        %2630 = vrot.lane.b32.xlu0 %v2612, 28
        %v2631 = vpop.permute.xlu0 %2630
        %2632 = vrot.lane.b32.xlu0 %v2613, 28
        %v2633 = vpop.permute.xlu0 %2632
        %2634 = vrot.lane.b32.xlu0 %v2614, 28
        %v2635 = vpop.permute.xlu0 %2634
        %2636 = vrot.lane.b32.xlu0 %v2615, 28
        %v2637 = vpop.permute.xlu0 %2636
        %2638 = vrot.lane.b32.xlu0 %v2616, 28
        %v2639 = vpop.permute.xlu0 %2638
        %2640 = vrot.lane.b32.xlu0 %v2617, 28
        %v2641 = vpop.permute.xlu0 %2640
        %2642 = vrot.lane.b32.xlu0 %v2618, 28
        %v2643 = vpop.permute.xlu0 %2642
        %2644 = vrot.lane.b32.xlu0 %v2619, 28
        %v2645 = vpop.permute.xlu0 %2644
        %2646 = vrot.lane.b32.xlu0 %v2620, 28
        %v2647 = vpop.permute.xlu0 %2646
        %2648 = vrot.lane.b32.xlu0 %v2621, 28
        %v2649 = vpop.permute.xlu0 %2648
        %2650 = vrot.lane.b32.xlu0 %v2622, 28
        %v2651 = vpop.permute.xlu0 %2650
        %2652 = vrot.lane.b32.xlu0 %v2623, 28
        %v2653 = vpop.permute.xlu0 %2652
        %2654 = vrot.lane.b32.xlu0 %v2624, 28
        %v2655 = vpop.permute.xlu0 %2654
        %2656 = vrot.lane.b32.xlu0 %v2625, 28
        %v2657 = vpop.permute.xlu0 %2656
        %v2658 = vunpack.c.l.b16 %v1893
        %v2659 = vunpack.c.l.b16 %v1896
        %v2660 = vunpack.c.l.b16 %v1900
        %v2661 = vunpack.c.l.b16 %v1903
        %v2662 = vunpack.c.l.b16 %v1907
        %v2663 = vunpack.c.l.b16 %v1910
        %v2664 = vunpack.c.l.b16 %v1914
        %v2665 = vunpack.c.l.b16 %v1917
        %v2666 = vunpack.c.l.b16 %v1921
        %v2667 = vunpack.c.l.b16 %v1924
        %v2668 = vunpack.c.l.b16 %v1928
        %v2669 = vunpack.c.l.b16 %v1931
        %v2670 = vunpack.c.l.b16 %v1935
        %v2671 = vunpack.c.l.b16 %v1938
        %v2672 = vunpack.c.l.b16 %v1942
        %v2673 = vunpack.c.l.b16 %v1945
        %v2674 = vunpack.c.l.b16 %v1949
        %v2675 = vunpack.c.l.b16 %v1952
        %v2676 = vunpack.c.l.b16 %v1956
        %v2677 = vunpack.c.l.b16 %v1959
        %v2678 = vunpack.c.l.b16 %v1963
        %v2679 = vunpack.c.l.b16 %v1966
        %v2680 = vunpack.c.l.b16 %v1970
        %v2681 = vunpack.c.l.b16 %v1973
        %v2682 = vunpack.c.l.b16 %v1977
        %v2683 = vunpack.c.l.b16 %v1980
        %v2684 = vunpack.c.l.b16 %v1984
        %v2685 = vunpack.c.l.b16 %v1987
        %v2686 = vunpack.c.l.b16 %v1991
        %v2687 = vunpack.c.l.b16 %v1994
        %v2688 = vunpack.c.l.b16 %v1998
        %v2689 = vunpack.c.l.b16 %v2001
        %v2690 = vpack.c.b16 %v2659, %v2658
        %v2691 = vpack.c.b16 %v2661, %v2660
        %v2692 = vpack.c.b16 %v2663, %v2662
        %v2693 = vpack.c.b16 %v2665, %v2664
        %v2694 = vpack.c.b16 %v2667, %v2666
        %v2695 = vpack.c.b16 %v2669, %v2668
        %v2696 = vpack.c.b16 %v2671, %v2670
        %v2697 = vpack.c.b16 %v2673, %v2672
        %v2698 = vpack.c.b16 %v2675, %v2674
        %v2699 = vpack.c.b16 %v2677, %v2676
        %v2700 = vpack.c.b16 %v2679, %v2678
        %v2701 = vpack.c.b16 %v2681, %v2680
        %v2702 = vpack.c.b16 %v2683, %v2682
        %v2703 = vpack.c.b16 %v2685, %v2684
        %v2704 = vpack.c.b16 %v2687, %v2686
        %v2705 = vpack.c.b16 %v2689, %v2688
        %2706 = vrot.lane.b32.xlu0 %v2690, 32
        %v2707 = vpop.permute.xlu0 %2706
        %2708 = vrot.lane.b32.xlu0 %v2691, 32
        %v2709 = vpop.permute.xlu0 %2708
        %2710 = vrot.lane.b32.xlu0 %v2692, 32
        %v2711 = vpop.permute.xlu0 %2710
        %2712 = vrot.lane.b32.xlu0 %v2693, 32
        %v2713 = vpop.permute.xlu0 %2712
        %2714 = vrot.lane.b32.xlu0 %v2694, 32
        %v2715 = vpop.permute.xlu0 %2714
        %2716 = vrot.lane.b32.xlu0 %v2695, 32
        %v2717 = vpop.permute.xlu0 %2716
        %2718 = vrot.lane.b32.xlu0 %v2696, 32
        %v2719 = vpop.permute.xlu0 %2718
        %2720 = vrot.lane.b32.xlu0 %v2697, 32
        %v2721 = vpop.permute.xlu0 %2720
        %2722 = vrot.lane.b32.xlu0 %v2698, 32
        %v2723 = vpop.permute.xlu0 %2722
        %2724 = vrot.lane.b32.xlu0 %v2699, 32
        %v2725 = vpop.permute.xlu0 %2724
        %2726 = vrot.lane.b32.xlu0 %v2700, 32
        %v2727 = vpop.permute.xlu0 %2726
        %2728 = vrot.lane.b32.xlu0 %v2701, 32
        %v2729 = vpop.permute.xlu0 %2728
        %2730 = vrot.lane.b32.xlu0 %v2702, 32
        %v2731 = vpop.permute.xlu0 %2730
        %2732 = vrot.lane.b32.xlu0 %v2703, 32
        %v2733 = vpop.permute.xlu0 %2732
        %2734 = vrot.lane.b32.xlu0 %v2704, 32
        %v2735 = vpop.permute.xlu0 %2734
        %2736 = vrot.lane.b32.xlu0 %v2705, 32
        %v2737 = vpop.permute.xlu0 %2736
        %vm2738 = vcmask 31744
        %v2741 = vsel %vm2738, %v2050, %v2115
        %v2744 = vsel %vm2738, %v2051, %v2117
        %v2747 = vsel %vm2738, %v2052, %v2119
        %v2750 = vsel %vm2738, %v2053, %v2121
        %v2753 = vsel %vm2738, %v2054, %v2123
        %v2756 = vsel %vm2738, %v2055, %v2125
        %v2759 = vsel %vm2738, %v2056, %v2127
        %v2762 = vsel %vm2738, %v2057, %v2129
        %v2765 = vsel %vm2738, %v2058, %v2131
        %v2768 = vsel %vm2738, %v2059, %v2133
        %v2771 = vsel %vm2738, %v2060, %v2135
        %v2774 = vsel %vm2738, %v2061, %v2137
        %v2777 = vsel %vm2738, %v2062, %v2139
        %v2780 = vsel %vm2738, %v2063, %v2141
        %v2783 = vsel %vm2738, %v2064, %v2143
        %v2786 = vsel %vm2738, %v2065, %v2145
        %vm2787 = vcmask 64512
        %v2789 = vsel %vm2787, %v2741, %v2195
        %v2791 = vsel %vm2787, %v2744, %v2197
        %v2793 = vsel %vm2787, %v2747, %v2199
        %v2795 = vsel %vm2787, %v2750, %v2201
        %v2797 = vsel %vm2787, %v2753, %v2203
        %v2799 = vsel %vm2787, %v2756, %v2205
        %v2801 = vsel %vm2787, %v2759, %v2207
        %v2803 = vsel %vm2787, %v2762, %v2209
        %v2805 = vsel %vm2787, %v2765, %v2211
        %v2807 = vsel %vm2787, %v2768, %v2213
        %v2809 = vsel %vm2787, %v2771, %v2215
        %v2811 = vsel %vm2787, %v2774, %v2217
        %v2813 = vsel %vm2787, %v2777, %v2219
        %v2815 = vsel %vm2787, %v2780, %v2221
        %v2817 = vsel %vm2787, %v2783, %v2223
        %v2819 = vsel %vm2787, %v2786, %v2225
        %vm2820 = vcmask 97280
        %v2822 = vsel %vm2820, %v2789, %v2291
        %v2824 = vsel %vm2820, %v2791, %v2293
        %v2826 = vsel %vm2820, %v2793, %v2295
        %v2828 = vsel %vm2820, %v2795, %v2297
        %v2830 = vsel %vm2820, %v2797, %v2299
        %v2832 = vsel %vm2820, %v2799, %v2301
        %v2834 = vsel %vm2820, %v2801, %v2303
        %v2836 = vsel %vm2820, %v2803, %v2305
        %v2838 = vsel %vm2820, %v2805, %v2307
        %v2840 = vsel %vm2820, %v2807, %v2309
        %v2842 = vsel %vm2820, %v2809, %v2311
        %v2844 = vsel %vm2820, %v2811, %v2313
        %v2846 = vsel %vm2820, %v2813, %v2315
        %v2848 = vsel %vm2820, %v2815, %v2317
        %v2850 = vsel %vm2820, %v2817, %v2319
        %v2852 = vsel %vm2820, %v2819, %v2321
        %vm2853 = vcmask 130048
        %v2855 = vsel %vm2853, %v2822, %v2371
        %v2857 = vsel %vm2853, %v2824, %v2373
        %v2859 = vsel %vm2853, %v2826, %v2375
        %v2861 = vsel %vm2853, %v2828, %v2377
        %v2863 = vsel %vm2853, %v2830, %v2379
        %v2865 = vsel %vm2853, %v2832, %v2381
        %v2867 = vsel %vm2853, %v2834, %v2383
        %v2869 = vsel %vm2853, %v2836, %v2385
        %v2871 = vsel %vm2853, %v2838, %v2387
        %v2873 = vsel %vm2853, %v2840, %v2389
        %v2875 = vsel %vm2853, %v2842, %v2391
        %v2877 = vsel %vm2853, %v2844, %v2393
        %v2879 = vsel %vm2853, %v2846, %v2395
        %v2881 = vsel %vm2853, %v2848, %v2397
        %v2883 = vsel %vm2853, %v2850, %v2399
        %v2885 = vsel %vm2853, %v2852, %v2401
        %vm2886 = vcmask 162816
        %v2888 = vsel %vm2886, %v2855, %v2451
        %v2890 = vsel %vm2886, %v2857, %v2453
        %v2892 = vsel %vm2886, %v2859, %v2455
        %v2894 = vsel %vm2886, %v2861, %v2457
        %v2896 = vsel %vm2886, %v2863, %v2459
        %v2898 = vsel %vm2886, %v2865, %v2461
        %v2900 = vsel %vm2886, %v2867, %v2463
        %v2902 = vsel %vm2886, %v2869, %v2465
        %v2904 = vsel %vm2886, %v2871, %v2467
        %v2906 = vsel %vm2886, %v2873, %v2469
        %v2908 = vsel %vm2886, %v2875, %v2471
        %v2910 = vsel %vm2886, %v2877, %v2473
        %v2912 = vsel %vm2886, %v2879, %v2475
        %v2914 = vsel %vm2886, %v2881, %v2477
        %v2916 = vsel %vm2886, %v2883, %v2479
        %v2918 = vsel %vm2886, %v2885, %v2481
        %vm2919 = vcmask 195584
        %v2921 = vsel %vm2919, %v2888, %v2547
        %v2923 = vsel %vm2919, %v2890, %v2549
        %v2925 = vsel %vm2919, %v2892, %v2551
        %v2927 = vsel %vm2919, %v2894, %v2553
        %v2929 = vsel %vm2919, %v2896, %v2555
        %v2931 = vsel %vm2919, %v2898, %v2557
        %v2933 = vsel %vm2919, %v2900, %v2559
        %v2935 = vsel %vm2919, %v2902, %v2561
        %v2937 = vsel %vm2919, %v2904, %v2563
        %v2939 = vsel %vm2919, %v2906, %v2565
        %v2941 = vsel %vm2919, %v2908, %v2567
        %v2943 = vsel %vm2919, %v2910, %v2569
        %v2945 = vsel %vm2919, %v2912, %v2571
        %v2947 = vsel %vm2919, %v2914, %v2573
        %v2949 = vsel %vm2919, %v2916, %v2575
        %v2951 = vsel %vm2919, %v2918, %v2577
        %vm2952 = vcmask 228352
        %v2954 = vsel %vm2952, %v2921, %v2627
        %v2956 = vsel %vm2952, %v2923, %v2629
        %v2958 = vsel %vm2952, %v2925, %v2631
        %v2960 = vsel %vm2952, %v2927, %v2633
        %v2962 = vsel %vm2952, %v2929, %v2635
        %v2964 = vsel %vm2952, %v2931, %v2637
        %v2966 = vsel %vm2952, %v2933, %v2639
        %v2968 = vsel %vm2952, %v2935, %v2641
        %v2970 = vsel %vm2952, %v2937, %v2643
        %v2972 = vsel %vm2952, %v2939, %v2645
        %v2974 = vsel %vm2952, %v2941, %v2647
        %v2976 = vsel %vm2952, %v2943, %v2649
        %v2978 = vsel %vm2952, %v2945, %v2651
        %v2980 = vsel %vm2952, %v2947, %v2653
        %v2982 = vsel %vm2952, %v2949, %v2655
        %v2984 = vsel %vm2952, %v2951, %v2657
        %vm2985 = vcmask 261120
        %v2987 = vsel %vm2985, %v2954, %v2707
        %v2989 = vsel %vm2985, %v2956, %v2709
        %v2991 = vsel %vm2985, %v2958, %v2711
        %v2993 = vsel %vm2985, %v2960, %v2713
        %v2995 = vsel %vm2985, %v2962, %v2715
        %v2997 = vsel %vm2985, %v2964, %v2717
        %v2999 = vsel %vm2985, %v2966, %v2719
        %v3001 = vsel %vm2985, %v2968, %v2721
        %v3003 = vsel %vm2985, %v2970, %v2723
        %v3005 = vsel %vm2985, %v2972, %v2725
        %v3007 = vsel %vm2985, %v2974, %v2727
        %v3009 = vsel %vm2985, %v2976, %v2729
        %v3011 = vsel %vm2985, %v2978, %v2731
        %v3013 = vsel %vm2985, %v2980, %v2733
        %v3015 = vsel %vm2985, %v2982, %v2735
        %v3017 = vsel %vm2985, %v2984, %v2737
        %v3018 = vld [vmem:[%s1] sm:$0xf]
        %v3019 = vld [vmem:[%s1 + $0x4] sm:$0xf]
        %v3020 = vld [vmem:[%s1 + $0x8] sm:$0xf]
        %v3021 = vld [vmem:[%s1 + $0xc] sm:$0xf]
        %v3022 = vld [vmem:[%s1 + $0x10] sm:$0x3]
        %v3028 = vunpack.c.l.b16 %v3018
        %v3029 = vunpack.c.l.b16 %v3019
        %v3030 = vunpack.c.l.b16 %v3020
        %v3031 = vunpack.c.l.b16 %v3021
        %v3032 = vunpack.c.l.b16 %v3022
        %v3033 = vpack.c.b16 %v3029, %v3028
        %v3034 = vpack.c.b16 %v3031, %v3030
        %v3035 = vpack.c.b16 %v3032, %v3032
        %vm3038 = vcmask 293888
        %v3039 = vsel %vm3038, %v2987, 0
        %v3041 = vsel %vm3038, %v2989, 0
        %v3043 = vsel %vm3038, %v2991, 0
        %v3045 = vsel %vm3038, %v2993, 0
        %v3047 = vsel %vm3038, %v2995, 0
        %v3049 = vsel %vm3038, %v2997, 0
        %v3051 = vsel %vm3038, %v2999, 0
        %v3053 = vsel %vm3038, %v3001, 0
        %v3055 = vsel %vm3038, %v3003, 0
        %v3057 = vsel %vm3038, %v3005, 0
        %v3059 = vsel %vm3038, %v3007, 0
        %v3061 = vsel %vm3038, %v3009, 0
        %v3063 = vsel %vm3038, %v3011, 0
        %v3065 = vsel %vm3038, %v3013, 0
        %v3067 = vsel %vm3038, %v3015, 0
        %v3069 = vsel %vm3038, %v3017, 0
        %vm3071 = vcmask 1041408
        %v3073 = vsel %vm3071, %v3035, 0
        %3075 = vmatprep.subr.bf16.mxu0 0
        %3076 = vmatpush1.bf16.msra.mxu0 %v3033
        %3077 = vmatprep.subr.bf16.mxu0 0
        %3078 = vmatpush1.bf16.msra.mxu0 %v3034
        %3079 = vmatprep.subr.bf16.mxu0 0
        %3080 = vmatpush1.bf16.msra.mxu0 %v3073
        %3081 = vmatprep.subr.bf16.mxu0 0
        %3082 = vmatpush1.bf16.msra.mxu0 0
        %3083 = vmatprep.subr.bf16.mxu0 0
        %3084 = vmatpush1.bf16.msra.mxu0 0
        %3085 = vmatprep.subr.bf16.mxu0 0
        %3086 = vmatpush1.bf16.msra.mxu0 0
        %3087 = vmatprep.subr.bf16.mxu0 0
        %3088 = vmatpush1.bf16.msra.mxu0 0
        %3089 = vmatprep.subr.bf16.mxu0 0
        %3090 = vmatpush1.bf16.msra.mxu0 0
        %3091 = vmatprep.subr.bf16.mxu0 0
        %3092 = vmatpush1.bf16.msra.mxu0 0
        %3093 = vmatprep.subr.bf16.mxu0 0
        %3094 = vmatpush1.bf16.msra.mxu0 0
        %3095 = vmatprep.subr.bf16.mxu0 0
        %3096 = vmatpush1.bf16.msra.mxu0 0
        %3097 = vmatprep.subr.bf16.mxu0 0
        %3098 = vmatpush1.bf16.msra.mxu0 0
        %3099 = vmatprep.subr.bf16.mxu0 0
        %3100 = vmatpush1.bf16.msra.mxu0 0
        %3101 = vmatprep.subr.bf16.mxu0 0
        %3102 = vmatpush1.bf16.msra.mxu0 0
        %3103 = vmatprep.subr.bf16.mxu0 0
        %3104 = vmatpush1.bf16.msra.mxu0 0
        %3105 = vmatprep.subr.bf16.mxu0 0
        %3106 = vmatpush1.bf16.msra.mxu0 0
        %3107 = vmatprep.mubr.bf16.mxu0 0
        %3108 = vmatmul.mubr.bf16.gmra.mrb[0].mxu0 %v3039
        %v3109 = vpop.f32.mrb[0].mxu0
        %v3110 = vadd.f32 0.0, %v3109
        %v3111 = vpop.f32.mrb[0].mxu0
        %v3112 = vpop.f32.mrb[0].mxu0
        %v3113 = vadd.f32 0.0, %v3112
        %v3114 = vpop.f32.mrb[0].mxu0
        %3115 = vmatprep.mubr.bf16.mxu0 0
        %3116 = vmatmul.mubr.bf16.gmra.mrb[0].mxu0 %v3041
        %v3117 = vpop.f32.mrb[0].mxu0
        %v3118 = vadd.f32 0.0, %v3117
        %v3119 = vpop.f32.mrb[0].mxu0
        %v3120 = vpop.f32.mrb[0].mxu0
        %v3121 = vadd.f32 0.0, %v3120
        %v3122 = vpop.f32.mrb[0].mxu0
        %3123 = vmatprep.mubr.bf16.mxu0 0
        %3124 = vmatmul.mubr.bf16.gmra.mrb[0].mxu0 %v3043
        %v3125 = vpop.f32.mrb[0].mxu0
        %v3126 = vadd.f32 0.0, %v3125
        %v3127 = vpop.f32.mrb[0].mxu0
        %v3128 = vpop.f32.mrb[0].mxu0
        %v3129 = vadd.f32 0.0, %v3128
        %v3130 = vpop.f32.mrb[0].mxu0
        %3131 = vmatprep.mubr.bf16.mxu0 0
        %3132 = vmatmul.mubr.bf16.gmra.mrb[0].mxu0 %v3045
        %v3133 = vpop.f32.mrb[0].mxu0
        %v3134 = vadd.f32 0.0, %v3133
        %v3135 = vpop.f32.mrb[0].mxu0
        %v3136 = vpop.f32.mrb[0].mxu0
        %v3137 = vadd.f32 0.0, %v3136
        %v3138 = vpop.f32.mrb[0].mxu0
        %3139 = vmatprep.mubr.bf16.mxu0 0
        %3140 = vmatmul.mubr.bf16.gmra.mrb[0].mxu0 %v3047
        %v3141 = vpop.f32.mrb[0].mxu0
        %v3142 = vadd.f32 0.0, %v3141
        %v3143 = vpop.f32.mrb[0].mxu0
        %v3144 = vpop.f32.mrb[0].mxu0
        %v3145 = vadd.f32 0.0, %v3144
        %v3146 = vpop.f32.mrb[0].mxu0
        %3147 = vmatprep.mubr.bf16.mxu0 0
        %3148 = vmatmul.mubr.bf16.gmra.mrb[0].mxu0 %v3049
        %v3149 = vpop.f32.mrb[0].mxu0
        %v3150 = vadd.f32 0.0, %v3149
        %v3151 = vpop.f32.mrb[0].mxu0
        %v3152 = vpop.f32.mrb[0].mxu0
        %v3153 = vadd.f32 0.0, %v3152
        %v3154 = vpop.f32.mrb[0].mxu0
        %3155 = vmatprep.mubr.bf16.mxu0 0
        %3156 = vmatmul.mubr.bf16.gmra.mrb[0].mxu0 %v3051
        %v3157 = vpop.f32.mrb[0].mxu0
        %v3158 = vadd.f32 0.0, %v3157
        %v3159 = vpop.f32.mrb[0].mxu0
        %v3160 = vpop.f32.mrb[0].mxu0
        %v3161 = vadd.f32 0.0, %v3160
        %v3162 = vpop.f32.mrb[0].mxu0
        %3163 = vmatprep.mubr.bf16.mxu0 0
        %3164 = vmatmul.mubr.bf16.gmra.mrb[0].mxu0 %v3053
        %v3165 = vpop.f32.mrb[0].mxu0
        %v3166 = vadd.f32 0.0, %v3165
        %v3167 = vpop.f32.mrb[0].mxu0
        %v3168 = vpop.f32.mrb[0].mxu0
        %v3169 = vadd.f32 0.0, %v3168
        %v3170 = vpop.f32.mrb[0].mxu0
        %3171 = vmatprep.mubr.bf16.mxu0 0
        %3172 = vmatmul.mubr.bf16.gmra.mrb[0].mxu0 %v3055
        %v3173 = vpop.f32.mrb[0].mxu0
        %v3174 = vadd.f32 0.0, %v3173
        %v3175 = vpop.f32.mrb[0].mxu0
        %v3176 = vpop.f32.mrb[0].mxu0
        %v3177 = vadd.f32 0.0, %v3176
        %v3178 = vpop.f32.mrb[0].mxu0
        %3179 = vmatprep.mubr.bf16.mxu0 0
        %3180 = vmatmul.mubr.bf16.gmra.mrb[0].mxu0 %v3057
        %v3181 = vpop.f32.mrb[0].mxu0
        %v3182 = vadd.f32 0.0, %v3181
        %v3183 = vpop.f32.mrb[0].mxu0
        %v3184 = vpop.f32.mrb[0].mxu0
        %v3185 = vadd.f32 0.0, %v3184
        %v3186 = vpop.f32.mrb[0].mxu0
        %3187 = vmatprep.mubr.bf16.mxu0 0
        %3188 = vmatmul.mubr.bf16.gmra.mrb[0].mxu0 %v3059
        %v3189 = vpop.f32.mrb[0].mxu0
        %v3190 = vadd.f32 0.0, %v3189
        %v3191 = vpop.f32.mrb[0].mxu0
        %v3192 = vpop.f32.mrb[0].mxu0
        %v3193 = vadd.f32 0.0, %v3192
        %v3194 = vpop.f32.mrb[0].mxu0
        %3195 = vmatprep.mubr.bf16.mxu0 0
        %3196 = vmatmul.mubr.bf16.gmra.mrb[0].mxu0 %v3061
        %v3197 = vpop.f32.mrb[0].mxu0
        %v3198 = vadd.f32 0.0, %v3197
        %v3199 = vpop.f32.mrb[0].mxu0
        %v3200 = vpop.f32.mrb[0].mxu0
        %v3201 = vadd.f32 0.0, %v3200
        %v3202 = vpop.f32.mrb[0].mxu0
        %3203 = vmatprep.mubr.bf16.mxu0 0
        %3204 = vmatmul.mubr.bf16.gmra.mrb[0].mxu0 %v3063
        %v3205 = vpop.f32.mrb[0].mxu0
        %v3206 = vadd.f32 0.0, %v3205
        %v3207 = vpop.f32.mrb[0].mxu0
        %v3208 = vpop.f32.mrb[0].mxu0
        %v3209 = vadd.f32 0.0, %v3208
        %v3210 = vpop.f32.mrb[0].mxu0
        %3211 = vmatprep.mubr.bf16.mxu0 0
        %3212 = vmatmul.mubr.bf16.gmra.mrb[0].mxu0 %v3065
        %v3213 = vpop.f32.mrb[0].mxu0
        %v3214 = vadd.f32 0.0, %v3213
        %v3215 = vpop.f32.mrb[0].mxu0
        %v3216 = vpop.f32.mrb[0].mxu0
        %v3217 = vadd.f32 0.0, %v3216
        %v3218 = vpop.f32.mrb[0].mxu0
        %3219 = vmatprep.mubr.bf16.mxu0 0
        %3220 = vmatmul.mubr.bf16.gmra.mrb[0].mxu0 %v3067
        %v3221 = vpop.f32.mrb[0].mxu0
        %v3222 = vadd.f32 0.0, %v3221
        %v3223 = vpop.f32.mrb[0].mxu0
        %v3224 = vpop.f32.mrb[0].mxu0
        %v3225 = vadd.f32 0.0, %v3224
        %v3226 = vpop.f32.mrb[0].mxu0
        %3227 = vmatprep.mubr.bf16.mxu0 0
        %3228 = vmatmul.mubr.bf16.gmra.mrb[0].mxu0 %v3069
        %v3229 = vpop.f32.mrb[0].mxu0
        %v3230 = vadd.f32 0.0, %v3229
        %v3231 = vpop.f32.mrb[0].mxu0
        %v3232 = vpop.f32.mrb[0].mxu0
        %v3233 = vadd.f32 0.0, %v3232
        %v3234 = vpop.f32.mrb[0].mxu0
        %3235 = vdwg.mxu0
        %v3236 = vmax.f32 %v3110, %v3118
        %v3237 = vmax.f32 %v3113, %v3121
        %v3238 = vmax.f32 %v3126, %v3134
        %v3239 = vmax.f32 %v3129, %v3137
        %v3240 = vmax.f32 %v3142, %v3150
        %v3241 = vmax.f32 %v3145, %v3153
        %v3242 = vmax.f32 %v3158, %v3166
        %v3243 = vmax.f32 %v3161, %v3169
        %v3244 = vmax.f32 %v3174, %v3182
        %v3245 = vmax.f32 %v3177, %v3185
        %v3246 = vmax.f32 %v3190, %v3198
        %v3247 = vmax.f32 %v3193, %v3201
        %v3248 = vmax.f32 %v3206, %v3214
        %v3249 = vmax.f32 %v3209, %v3217
        %v3250 = vmax.f32 %v3222, %v3230
        %v3251 = vmax.f32 %v3225, %v3233
        %3252 = vst.msk [vmem:[#allocation2] sm:$0xff] %vm2787, %v3236
        %3253 = vst.msk [vmem:[#allocation2 + $0x8] sm:$0xff] %vm2787, %v3237
        %3254 = vst.msk [vmem:[#allocation2 + $0x10] sm:$0xff] %vm2787, %v3238
        %3255 = vst.msk [vmem:[#allocation2 + $0x18] sm:$0xff] %vm2787, %v3239
        %3256 = vst.msk [vmem:[#allocation2 + $0x20] sm:$0xff] %vm2787, %v3240
        %3257 = vst.msk [vmem:[#allocation2 + $0x28] sm:$0xff] %vm2787, %v3241
        %3258 = vst.msk [vmem:[#allocation2 + $0x30] sm:$0xff] %vm2787, %v3242
        %3259 = vst.msk [vmem:[#allocation2 + $0x38] sm:$0xff] %vm2787, %v3243
        %3260 = vst.msk [vmem:[#allocation2 + $0x40] sm:$0xff] %vm2787, %v3244
        %3261 = vst.msk [vmem:[#allocation2 + $0x48] sm:$0xff] %vm2787, %v3245
        %3262 = vst.msk [vmem:[#allocation2 + $0x50] sm:$0xff] %vm2787, %v3246
        %3263 = vst.msk [vmem:[#allocation2 + $0x58] sm:$0xff] %vm2787, %v3247
        %3264 = vst.msk [vmem:[#allocation2 + $0x60] sm:$0xff] %vm2787, %v3248
        %3265 = vst.msk [vmem:[#allocation2 + $0x68] sm:$0xff] %vm2787, %v3249
        %3266 = vst.msk [vmem:[#allocation2 + $0x70] sm:$0xff] %vm2787, %v3250
        %3267 = vst.msk [vmem:[#allocation2 + $0x78] sm:$0xff] %vm2787, %v3251
        %v3268 = vld [vmem:[#allocation2] ss:$2 sm:$0xff]
        %s3269 = scalar_lea.vmem [#allocation2], 16
        %v3270 = vld [vmem:[%s3269] ss:$2 sm:$0xff]
        %s3271 = scalar_lea.vmem [#allocation2], 32
        %v3272 = vld [vmem:[%s3271] ss:$2 sm:$0xff]
        %s3273 = scalar_lea.vmem [#allocation2], 48
        %v3274 = vld [vmem:[%s3273] ss:$2 sm:$0xff]
        %s3275 = scalar_lea.vmem [#allocation2], 64
        %v3276 = vld [vmem:[%s3275] ss:$2 sm:$0xff]
        %s3277 = scalar_lea.vmem [#allocation2], 80
        %v3278 = vld [vmem:[%s3277] ss:$2 sm:$0xff]
        %s3279 = scalar_lea.vmem [#allocation2], 96
        %v3280 = vld [vmem:[%s3279] ss:$2 sm:$0xff]
        %s3281 = scalar_lea.vmem [#allocation2], 112
        %v3282 = vld [vmem:[%s3281] ss:$2 sm:$0xff]
        %s3283 = scalar_lea.vmem [#allocation2], 1
        %v3284 = vld [vmem:[%s3283] ss:$2 sm:$0xff]
        %s3285 = scalar_lea.vmem [#allocation2], 17
        %v3286 = vld [vmem:[%s3285] ss:$2 sm:$0xff]
        %s3287 = scalar_lea.vmem [#allocation2], 33
        %v3288 = vld [vmem:[%s3287] ss:$2 sm:$0xff]
        %s3289 = scalar_lea.vmem [#allocation2], 49
        %v3290 = vld [vmem:[%s3289] ss:$2 sm:$0xff]
        %s3291 = scalar_lea.vmem [#allocation2], 65
        %v3292 = vld [vmem:[%s3291] ss:$2 sm:$0xff]
        %s3293 = scalar_lea.vmem [#allocation2], 81
        %v3294 = vld [vmem:[%s3293] ss:$2 sm:$0xff]
        %s3295 = scalar_lea.vmem [#allocation2], 97
        %v3296 = vld [vmem:[%s3295] ss:$2 sm:$0xff]
        %s3297 = scalar_lea.vmem [#allocation2], 113
        %v3298 = vld [vmem:[%s3297] ss:$2 sm:$0xff]
        %v3299 = vmax.f32 %v3268, %v3284
        %v3300 = vmax.f32 %v3270, %v3286
        %v3301 = vmax.f32 %v3272, %v3288
        %v3302 = vmax.f32 %v3274, %v3290
        %v3303 = vmax.f32 %v3276, %v3292
        %v3304 = vmax.f32 %v3278, %v3294
        %v3305 = vmax.f32 %v3280, %v3296
        %v3306 = vmax.f32 %v3282, %v3298
        %3307 = vxpose.xlu0.b32.start [1/16] %v3299, 128
        %3308 = vxpose.xlu0.b32.cont [2/16] %v3300, 128
        %3309 = vxpose.xlu0.b32.cont [3/16] %v3301, 128
        %3310 = vxpose.xlu0.b32.cont [4/16] %v3302, 128
        %3311 = vxpose.xlu0.b32.cont [5/16] %v3303, 128
        %3312 = vxpose.xlu0.b32.cont [6/16] %v3304, 128
        %3313 = vxpose.xlu0.b32.cont [7/16] %v3305, 128
        %3314 = vxpose.xlu0.b32.cont [8/16] %v3306, 128
        %3315 = vxpose.xlu0.b32.cont [9/16] 0.0, 128
        %3316 = vxpose.xlu0.b32.cont [10/16] 0.0, 128
        %3317 = vxpose.xlu0.b32.cont [11/16] 0.0, 128
        %3318 = vxpose.xlu0.b32.cont [12/16] 0.0, 128
        %3319 = vxpose.xlu0.b32.cont [13/16] 0.0, 128
        %3320 = vxpose.xlu0.b32.cont [14/16] 0.0, 128
        %3321 = vxpose.xlu0.b32.cont [15/16] 0.0, 128
        %3322 = vxpose.xlu0.b32.end [16/16] 0.0, 128
        %v3323 = vpop.trf.xlu0
        %v3324 = vpop.trf.xlu0
        %v3325 = vpop.trf.xlu0
        %v3326 = vpop.trf.xlu0
        %v3327 = vpop.trf.xlu0
        %v3328 = vpop.trf.xlu0
        %v3329 = vpop.trf.xlu0
        %v3330 = vpop.trf.xlu0
        %v3331 = vpop.trf.xlu0
        %v3332 = vpop.trf.xlu0
        %v3333 = vpop.trf.xlu0
        %v3334 = vpop.trf.xlu0
        %v3335 = vpop.trf.xlu0
        %v3336 = vpop.trf.xlu0
        %v3337 = vpop.trf.xlu0
        %v3338 = vpop.trf.xlu0
        %v3339 = vld [vmem:[%s2] sm:$0xff]
        %3341 = vset.pattern.permute.xlu0 0
        %3342 = vperm.xlu0 %3341, %v3339
        %v3343 = vpop.permute.xlu0 %3342
        %v3345 = vadd.f32 %v3323, %v3343
        %v3346 = vmul.f32 %v3345, 0.1
        %v3347 = vmax.f32 %v3345, %v3346
        %3348 = vst [vmem:[%s163] sm:$0xff] %v3347
        %s3349 = sand.u32 %s93, 1
        %s3350 = scalar_lea.sflag [#allocation4], %s3349
        %s3351 = sand.u32 %s93, 1
        %s3352 = smul.addr %s3351, 8
        %s3353 = scalar_lea.vmem [#allocation3], %s3352
        // Predicated region
        $region33: #{tpu_custom_call.1} parent=31 // pred_check
          %p3354 = pneg %p103
        $region34: #{tpu_custom_call.1} parent=31 // pred_check_branch
          %3356 = sbr.rel (%p3354) target = $region36
        $region35: #{tpu_custom_call.1} parent=31 // pred_region
          %s3358 = ssub.s32 128, 128
          %3359 = vsyncadd %s3350, %s3358
          %s3360 = smul.addr %s17, 128
          %s3361 = scalar_lea.hbm %s3, %s3360
          %s3363 = sshll.u32 %s3353, 4
          %s3364 = int_to_ptr.vmem [resolvable:$true] %s3363
          %3366 = dma.vmem_to_hbm [thread:$0]  %s3364, 128, %s3361, %s3350
        $region36: #{tpu_custom_call.1} parent=31 // pred_fallthru
          _
      $region32: #{tpu_custom_call.1} parent=5 // pred_fallthru
        _
      %p3367 = scmp.le.s32.totalorder 2, %s12
      // Predicated region
      $region37: #{tpu_custom_call.1} parent=5 // pred_check
        %p3368 = pneg %p3367
      $region38: #{tpu_custom_call.1} parent=5 // pred_check_branch
        %3370 = sbr.rel (%p3368) target = $region40
      $region39: #{tpu_custom_call.1} parent=5 // pred_region
        %s3371 = ssub.s32 %s12, 2
        // Predicated region
        $region41: #{tpu_custom_call.1} parent=39 // pred_check
          %p3372 = pneg %p109
        $region42: #{tpu_custom_call.1} parent=39 // pred_check_branch
          %3374 = sbr.rel (%p3372) target = $region44
        $region43: #{tpu_custom_call.1} parent=39 // pred_region
          %s3375 = sand.u32 %s94, 1
          %s3376 = scalar_lea.sflag [#allocation4], %s3375
          %s3377 = sand.u32 %s94, 1
          %s3378 = smul.addr %s3377, 8
          %s3379 = scalar_lea.vmem [#allocation3], %s3378
          %3380 = dma.done %s3376, 128
        $region44: #{tpu_custom_call.1} parent=39 // pred_fallthru
          _
      $region40: #{tpu_custom_call.1} parent=5 // pred_fallthru
        _
    $region6: #{tpu_custom_call.1} parent=1 // loop_footer
      %s16 = sadd.s32 1, %s12
    $region7: #{tpu_custom_call.1} parent=1 // loop_footer_branch
      %11 = sbr.rel target = $region3
    $region8: #{tpu_custom_call.1} parent=1 // loop_exit
      _
    %3381 = vsyncpa [#allocation4], 1
    %s3382 = scalar_lea.sflag [#allocation4], 1
    %3383 = vsyncpa %s3382, 1

</llo_original>
